<compile_context>
chip_gen: v7x
topology: tpu7x:2x2x1
jax: 0.10.0
libtpu: 0.0.40
codegen_flags: <defaults>
</compile_context>

<pallas_src>
import numpy as np
import jax
import jax.numpy as jnp
from jax.experimental import pallas as pl
from jax.experimental.pallas import tpu as pltpu


def _round_up(v, m):
    return (v + m - 1) // m * m


def _pick_row_tile(m):
    """Pick TM from {256,...,8} minimizing padding waste (prefer larger on tie)."""
    best_t, best_pad = 8, _round_up(m, 8)
    for t in (256, 128, 64, 32, 16, 8):
        pad = _round_up(m, t)
        if pad < best_pad or (pad == best_pad and t > best_t):
            best_t, best_pad = t, pad
    return best_t


# ----------------------------------------------------------------------------
# Parameter construction (replicates BQuantConv1d_simple2.__init__, method='sup',
# linear=False).  Pure JAX glue — runs once at "module build" time.
# ----------------------------------------------------------------------------
def build_bquant_params(weight, k=8):
    """weight: (nx, nf) float32 (HF Conv1D convention). Returns (scale, packed).

    scale : (nf, 1, k) float32
    packed: (nf, k, nx//8, 1) int8   (8 sign bits packed per byte, MSB = row 0)
    """
    w0 = weight
    m, n = w0.shape
    assert m % 8 == 0
    scale_list, binary_list = [], []
    w = w0
    for _ in range(k):
        absw = jnp.abs(w)
        sign = w > 0
        mini = jnp.min(absw, axis=0)
        maxi = jnp.max(absw, axis=0)
        s = (mini + maxi) / 2.0
        scale_list.append(s)
        binary_list.append(jnp.where(sign, 1.0, 0.0).astype(w0.dtype))
        w = w - jnp.where(sign, s[None, :], -s[None, :])
    scale = jnp.stack(scale_list, axis=1)[:, None, :]              # (n, 1, k)
    B = jnp.stack(binary_list, axis=0).reshape(k, m // 8, 8, n)
    binary_exp = jnp.array([2.0 ** e for e in range(7, -1, -1)],
                           dtype=w0.dtype).reshape(1, 1, 8)
    packed = jnp.matmul(binary_exp, B)                              # (k, m//8, 1, n)
    # float -> int32 -> int8 so values > 127 wrap exactly like torch's int8 cast
    packed = jnp.round(packed).astype(jnp.int32).astype(jnp.int8)
    packed = jnp.transpose(packed, (3, 0, 1, 2))                    # (n, k, m//8, 1)
    return scale, packed


# ----------------------------------------------------------------------------
# Fused dequant + matmul + bias kernel.
# ----------------------------------------------------------------------------
def _make_fused_kernel(bits, nxg, nx, tn):
    def kernel(x_ref, bin_ref, scale2_ref, ssum_ref, bias_ref, o_ref, w_ref):
        # x_ref     : (TM, nx)        f32  activation tile, columns pre-permuted
        #                                  so column q = jbit*nxg + g holds
        #                                  original feature g*8 + jbit.
        # bin_ref   : (bits, nxg, TN) i8   packed sign-bit planes (MSB = row 0)
        # scale2_ref: (bits, TN)      f32  2 * per-bit, per-channel scales
        # ssum_ref  : (1, TN)         f32  sum of scales over bits
        # bias_ref  : (1, TN)         f32
        # o_ref     : (TM, TN)        f32
        # w_ref     : (nx, TN)        f32  VMEM scratch, dequantized weight tile

        # Rebuild the weight tile only on the first row-tile of each column
        # tile; it stays resident in VMEM scratch across the whole M axis.
        @pl.when(pl.program_id(1) == 0)
        def _dequant():
            ssum = ssum_ref[...]                                         # (1, TN)
            # Hoist int8->int32 expansion and per-bit scale rows out of the
            # 8x-unrolled byte-bit loop (JAX does not CSE broadcasts).
            planes32 = [bin_ref[b].astype(jnp.int32) for b in range(bits)]  # (nxg, TN)
            s2 = [scale2_ref[b:b + 1, :] for b in range(bits)]              # (1, TN)
            for j in range(8):                     # bit position inside each byte
                mask = jnp.int32(1 << (7 - j))
                acc = None
                for b in range(bits):              # explicit add chain over planes
                    bit = (jnp.bitwise_and(planes32[b], mask) != 0).astype(jnp.float32)
                    term = s2[b] * bit
                    acc = term if acc is None else acc + term
                # w = sum_b s_b*(2*bit_b - 1) = sum_b (2*s_b)*bit_b - sum_b s_b
                # Rows of this chunk are original weight rows {g*8 + j}; the
                # activation columns were pre-permuted to this (j-major) order.
                w_ref[j * nxg:(j + 1) * nxg, :] = acc - ssum

        o_ref[...] = (jnp.dot(x_ref[...], w_ref[...],
                              preferred_element_type=jnp.float32)
                      + bias_ref[...])

    return kernel


# ----------------------------------------------------------------------------
# Forward pass wrapper.
# ----------------------------------------------------------------------------
def bquant_forward(x, packed_i8, scale, bias, bits):
    """Forward pass of BQuantConv1d_simple2.

    x        : (..., nx) float32
    packed_i8: (nf, bits, nx//8, 1) int8
    scale    : (nf, 1, bits) float32
    bias     : (nf,) float32
    """
    nf = scale.shape[0]
    nxg = packed_i8.shape[2]
    nx = nxg * 8
    size_out = x.shape[:-1] + (nf,)
    x2 = x.reshape(-1, nx).astype(jnp.float32)
    M = x2.shape[0]

    # ---- compact parameter prep (no bit expansion, no dense weight in HBM) ----
    planes = jnp.transpose(packed_i8[:, :bits, :, 0], (1, 2, 0))             # (bits, nxg, nf) i8
    scale_k = jnp.transpose(scale[:, 0, :bits], (1, 0)).astype(jnp.float32)  # (bits, nf)
    scale2 = 2.0 * scale_k                                                   # (bits, nf)
    ssum = jnp.sum(scale_k, axis=0, keepdims=True)                           # (1, nf)
    bias_f = bias.astype(jnp.float32)

    # ---- pad nf to a multiple of 128 for lane-dense tiles / stores ----
    nf_pad = _round_up(nf, 128)
    if nf_pad != nf:
        p = nf_pad - nf
        planes = jnp.pad(planes, ((0, 0), (0, 0), (0, p)))
        scale2 = jnp.pad(scale2, ((0, 0), (0, p)))
        ssum = jnp.pad(ssum, ((0, 0), (0, p)))
        bias_f = jnp.pad(bias_f, ((0, p),))
    bias2 = bias_f.reshape(1, nf_pad)

    # TN = 256 keeps the full-nx-resident tiles within v5e (16 MiB scoped) and
    # v7x (64 MiB physical) VMEM budgets; 128 if nf_pad is not a 256 multiple.
    TN = 256 if nf_pad % 256 == 0 else 128

    # ---- permute x columns so the kernel's bit-plane-ordered weight needs no
    #      transpose: new column q = jbit*nxg + g holds old column g*8 + jbit ----
    x_perm = jnp.transpose(x2.reshape(M, nxg, 8), (0, 2, 1)).reshape(M, nx)

    # ---- row tile: minimize padding waste over {256,...,8} ----
    TM = _pick_row_tile(M)
    M_pad = _round_up(M, TM)
    if M_pad != M:
        x_perm = jnp.pad(x_perm, ((0, M_pad - M), (0, 0)))

    grid = (nf_pad // TN, M_pad // TM)   # (nf tiles [parallel], M tiles [arbitrary])

    kernel = _make_fused_kernel(bits, nxg, nx, TN)

    # Explicit VMEM budget: double-buffered inputs/outputs + resident weight scratch.
    vmem_est = (2 * (TM * nx * 4 + bits * nxg * TN + TM * TN * 4
                     + bits * TN * 4 + 2 * TN * 4)
                + nx * TN * 4)
    vmem_limit = int(min(64 * 1024 * 1024, max(2 * vmem_est, 16 * 1024 * 1024)))

    cost = pl.CostEstimate(
        flops=int(2 * M_pad * nx * nf_pad),
        transcendentals=0,
        bytes_accessed=int(M_pad * nx * 4            # activations
                           + bits * nxg * nf_pad     # packed int8 planes
                           + 3 * bits * nf_pad * 4   # scales / ssum / bias (approx)
                           + M_pad * nf_pad * 4))    # output

    out = pl.pallas_call(
        kernel,
        out_shape=jax.ShapeDtypeStruct((M_pad, nf_pad), jnp.float32),
        grid=grid,
        in_specs=[
            pl.BlockSpec((TM, nx), lambda j, i: (i, 0)),            # permuted x tile
            pl.BlockSpec((bits, nxg, TN), lambda j, i: (0, 0, j)),  # packed planes i8
            pl.BlockSpec((bits, TN), lambda j, i: (0, j)),          # 2*scale
            pl.BlockSpec((1, TN), lambda j, i: (0, j)),             # sum of scales
            pl.BlockSpec((1, TN), lambda j, i: (0, j)),             # bias
        ],
        out_specs=pl.BlockSpec((TM, TN), lambda j, i: (i, j)),
        scratch_shapes=[pltpu.VMEM((nx, TN), jnp.float32)],
        compiler_params=pltpu.CompilerParams(
            dimension_semantics=("parallel", "arbitrary"),
            vmem_limit_bytes=vmem_limit),
        cost_estimate=cost,
    )(x_perm, planes, scale2, ssum, bias2)

    return out[:M, :nf].reshape(size_out)


# ----------------------------------------------------------------------------
# Pure-JAX reference mirroring the PyTorch forward exactly (for verification).
# ----------------------------------------------------------------------------
def ref_forward(x, packed_i8, scale, bias, bits):
    nf = scale.shape[0]
    nx = packed_i8.shape[2] * 8
    size_out = x.shape[:-1] + (nf,)
    x2 = x.reshape(-1, nx)
    b = jnp.broadcast_to(packed_i8[:, :bits], (nf, bits, nx // 8, 8)).astype(jnp.int32)
    exps = jnp.array([128, 64, 32, 16, 8, 4, 2, 1], dtype=jnp.int32).reshape(1, 1, 1, 8)
    wpm = jnp.where(jnp.bitwise_and(b, exps) == 0, -1.0, 1.0).astype(x.dtype)
    wpm = wpm.reshape(nf, bits, nx)
    weight = jnp.matmul(scale[:, :, :bits], wpm)[:, 0, :].T          # (nx, nf)
    out = bias + x2 @ weight
    return out.reshape(size_out)


if __name__ == "__main__":
    NX, NF, BITS = 64, 96, 8       # nx (in features), nf (out features), k bits
    B, S = 2, 8                    # batch, sequence

    key = jax.random.PRNGKey(0)
    k1, k2, k3 = jax.random.split(key, 3)
    conv_weight = jax.random.normal(k1, (NX, NF), jnp.float32) * 0.1   # HF Conv1D weight
    conv_bias = jax.random.normal(k2, (NF,), jnp.float32) * 0.1
    x = jax.random.normal(k3, (B, S, NX), jnp.float32)

    scale, packed = build_bquant_params(conv_weight, k=BITS)

    out = bquant_forward(x, packed, scale, conv_bias, BITS)
    out = jax.block_until_ready(out)
    assert out.shape == (B, S, NF)

    ref = ref_forward(x, packed, scale, conv_bias, BITS)
    np.testing.assert_allclose(np.asarray(out), np.asarray(ref), rtol=1e-4, atol=1e-4)

    print("KERNEL_OK")
</pallas_src>

<mosaic_0001>
module attributes {stable_mosaic.version = 11 : i64} {
  func.func @kernel(%arg0: i32, %arg1: i32, %arg2: memref<16x64xf32, #tpu.memory_space<vmem>>, %arg3: memref<8x8x128xi8, #tpu.memory_space<vmem>>, %arg4: memref<8x128xf32, #tpu.memory_space<vmem>>, %arg5: memref<1x128xf32, #tpu.memory_space<vmem>>, %arg6: memref<1x128xf32, #tpu.memory_space<vmem>>, %arg7: memref<16x128xf32, #tpu.memory_space<vmem>>, %arg8: memref<64x128xf32, #tpu.memory_space<vmem>>) attributes {dimension_semantics = [#tpu.dimension_semantics<parallel>, #tpu.dimension_semantics<arbitrary>], iteration_bounds = array<i64: 1, 1>, scalar_prefetch = 0 : i64, scratch_operands = 1 : i64, tpu.core_type = #tpu.core_type<tc>, window_params = [{transform_indices = @transform_0, window_bounds = array<i64: 16, 64>}, {transform_indices = @transform_1, window_bounds = array<i64: 8, 8, 128>}, {transform_indices = @transform_2, window_bounds = array<i64: 8, 128>}, {transform_indices = @transform_3, window_bounds = array<i64: 1, 128>}, {transform_indices = @transform_4, window_bounds = array<i64: 1, 128>}, {transform_indices = @transform_5, window_bounds = array<i64: 16, 128>}]} {
    %c0_i32 = arith.constant 0 : i32
    %0 = arith.cmpi eq, %arg1, %c0_i32 : i32
    %1 = arith.extui %0 : i1 to i32
    %c0_i32_0 = arith.constant 0 : i32
    %2 = arith.cmpi ne, %1, %c0_i32_0 : i32
    scf.if %2 {
      %c0_8 = arith.constant 0 : index
      %c0_9 = arith.constant 0 : index
      %10 = vector.load %arg5[%c0_8, %c0_9] : memref<1x128xf32, #tpu.memory_space<vmem>>, vector<1x128xf32>
      %c0_10 = arith.constant 0 : index
      %c0_11 = arith.constant 0 : index
      %c0_12 = arith.constant 0 : index
      %11 = vector.load %arg3[%c0_10, %c0_11, %c0_12] : memref<8x8x128xi8, #tpu.memory_space<vmem>>, vector<1x8x128xi8>
      %12 = vector.shape_cast %11 : vector<1x8x128xi8> to vector<8x128xi8>
      %13 = arith.extsi %12 : vector<8x128xi8> to vector<8x128xi32>
      %c1 = arith.constant 1 : index
      %c0_13 = arith.constant 0 : index
      %c0_14 = arith.constant 0 : index
      %14 = vector.load %arg3[%c1, %c0_13, %c0_14] : memref<8x8x128xi8, #tpu.memory_space<vmem>>, vector<1x8x128xi8>
      %15 = vector.shape_cast %14 : vector<1x8x128xi8> to vector<8x128xi8>
      %16 = arith.extsi %15 : vector<8x128xi8> to vector<8x128xi32>
      %c2 = arith.constant 2 : index
      %c0_15 = arith.constant 0 : index
      %c0_16 = arith.constant 0 : index
      %17 = vector.load %arg3[%c2, %c0_15, %c0_16] : memref<8x8x128xi8, #tpu.memory_space<vmem>>, vector<1x8x128xi8>
      %18 = vector.shape_cast %17 : vector<1x8x128xi8> to vector<8x128xi8>
      %19 = arith.extsi %18 : vector<8x128xi8> to vector<8x128xi32>
      %c3 = arith.constant 3 : index
      %c0_17 = arith.constant 0 : index
      %c0_18 = arith.constant 0 : index
      %20 = vector.load %arg3[%c3, %c0_17, %c0_18] : memref<8x8x128xi8, #tpu.memory_space<vmem>>, vector<1x8x128xi8>
      %21 = vector.shape_cast %20 : vector<1x8x128xi8> to vector<8x128xi8>
      %22 = arith.extsi %21 : vector<8x128xi8> to vector<8x128xi32>
      %c4 = arith.constant 4 : index
      %c0_19 = arith.constant 0 : index
      %c0_20 = arith.constant 0 : index
      %23 = vector.load %arg3[%c4, %c0_19, %c0_20] : memref<8x8x128xi8, #tpu.memory_space<vmem>>, vector<1x8x128xi8>
      %24 = vector.shape_cast %23 : vector<1x8x128xi8> to vector<8x128xi8>
      %25 = arith.extsi %24 : vector<8x128xi8> to vector<8x128xi32>
      %c5 = arith.constant 5 : index
      %c0_21 = arith.constant 0 : index
      %c0_22 = arith.constant 0 : index
      %26 = vector.load %arg3[%c5, %c0_21, %c0_22] : memref<8x8x128xi8, #tpu.memory_space<vmem>>, vector<1x8x128xi8>
      %27 = vector.shape_cast %26 : vector<1x8x128xi8> to vector<8x128xi8>
      %28 = arith.extsi %27 : vector<8x128xi8> to vector<8x128xi32>
      %c6 = arith.constant 6 : index
      %c0_23 = arith.constant 0 : index
      %c0_24 = arith.constant 0 : index
      %29 = vector.load %arg3[%c6, %c0_23, %c0_24] : memref<8x8x128xi8, #tpu.memory_space<vmem>>, vector<1x8x128xi8>
      %30 = vector.shape_cast %29 : vector<1x8x128xi8> to vector<8x128xi8>
      %31 = arith.extsi %30 : vector<8x128xi8> to vector<8x128xi32>
      %c7 = arith.constant 7 : index
      %c0_25 = arith.constant 0 : index
      %c0_26 = arith.constant 0 : index
      %32 = vector.load %arg3[%c7, %c0_25, %c0_26] : memref<8x8x128xi8, #tpu.memory_space<vmem>>, vector<1x8x128xi8>
      %33 = vector.shape_cast %32 : vector<1x8x128xi8> to vector<8x128xi8>
      %34 = arith.extsi %33 : vector<8x128xi8> to vector<8x128xi32>
      %c0_27 = arith.constant 0 : index
      %c0_28 = arith.constant 0 : index
      %35 = vector.load %arg4[%c0_27, %c0_28] : memref<8x128xf32, #tpu.memory_space<vmem>>, vector<1x128xf32>
      %c1_29 = arith.constant 1 : index
      %c0_30 = arith.constant 0 : index
      %36 = vector.load %arg4[%c1_29, %c0_30] : memref<8x128xf32, #tpu.memory_space<vmem>>, vector<1x128xf32>
      %c2_31 = arith.constant 2 : index
      %c0_32 = arith.constant 0 : index
      %37 = vector.load %arg4[%c2_31, %c0_32] : memref<8x128xf32, #tpu.memory_space<vmem>>, vector<1x128xf32>
      %c3_33 = arith.constant 3 : index
      %c0_34 = arith.constant 0 : index
      %38 = vector.load %arg4[%c3_33, %c0_34] : memref<8x128xf32, #tpu.memory_space<vmem>>, vector<1x128xf32>
      %c4_35 = arith.constant 4 : index
      %c0_36 = arith.constant 0 : index
      %39 = vector.load %arg4[%c4_35, %c0_36] : memref<8x128xf32, #tpu.memory_space<vmem>>, vector<1x128xf32>
      %c5_37 = arith.constant 5 : index
      %c0_38 = arith.constant 0 : index
      %40 = vector.load %arg4[%c5_37, %c0_38] : memref<8x128xf32, #tpu.memory_space<vmem>>, vector<1x128xf32>
      %c6_39 = arith.constant 6 : index
      %c0_40 = arith.constant 0 : index
      %41 = vector.load %arg4[%c6_39, %c0_40] : memref<8x128xf32, #tpu.memory_space<vmem>>, vector<1x128xf32>
      %c7_41 = arith.constant 7 : index
      %c0_42 = arith.constant 0 : index
      %42 = vector.load %arg4[%c7_41, %c0_42] : memref<8x128xf32, #tpu.memory_space<vmem>>, vector<1x128xf32>
      %c128_i32 = arith.constant 128 : i32
      %43 = vector.broadcast %c128_i32 : i32 to vector<8x128xi32>
      %44 = arith.andi %13, %43 : vector<8x128xi32>
      %c0_i32_43 = arith.constant 0 : i32
      %45 = vector.broadcast %c0_i32_43 : i32 to vector<8x128xi32>
      %46 = arith.cmpi ne, %44, %45 : vector<8x128xi32>
      %47 = arith.extui %46 : vector<8x128xi1> to vector<8x128xi32>
      %48 = arith.sitofp %47 : vector<8x128xi32> to vector<8x128xf32>
      %49 = vector.broadcast %35 : vector<1x128xf32> to vector<8x128xf32>
      %50 = arith.mulf %49, %48 : vector<8x128xf32>
      %c128_i32_44 = arith.constant 128 : i32
      %51 = vector.broadcast %c128_i32_44 : i32 to vector<8x128xi32>
      %52 = arith.andi %16, %51 : vector<8x128xi32>
      %c0_i32_45 = arith.constant 0 : i32
      %53 = vector.broadcast %c0_i32_45 : i32 to vector<8x128xi32>
      %54 = arith.cmpi ne, %52, %53 : vector<8x128xi32>
      %55 = arith.extui %54 : vector<8x128xi1> to vector<8x128xi32>
      %56 = arith.sitofp %55 : vector<8x128xi32> to vector<8x128xf32>
      %57 = vector.broadcast %36 : vector<1x128xf32> to vector<8x128xf32>
      %58 = arith.mulf %57, %56 : vector<8x128xf32>
      %59 = arith.addf %50, %58 : vector<8x128xf32>
      %c128_i32_46 = arith.constant 128 : i32
      %60 = vector.broadcast %c128_i32_46 : i32 to vector<8x128xi32>
      %61 = arith.andi %19, %60 : vector<8x128xi32>
      %c0_i32_47 = arith.constant 0 : i32
      %62 = vector.broadcast %c0_i32_47 : i32 to vector<8x128xi32>
      %63 = arith.cmpi ne, %61, %62 : vector<8x128xi32>
      %64 = arith.extui %63 : vector<8x128xi1> to vector<8x128xi32>
      %65 = arith.sitofp %64 : vector<8x128xi32> to vector<8x128xf32>
      %66 = vector.broadcast %37 : vector<1x128xf32> to vector<8x128xf32>
      %67 = arith.mulf %66, %65 : vector<8x128xf32>
      %68 = arith.addf %59, %67 : vector<8x128xf32>
      %c128_i32_48 = arith.constant 128 : i32
      %69 = vector.broadcast %c128_i32_48 : i32 to vector<8x128xi32>
      %70 = arith.andi %22, %69 : vector<8x128xi32>
      %c0_i32_49 = arith.constant 0 : i32
      %71 = vector.broadcast %c0_i32_49 : i32 to vector<8x128xi32>
      %72 = arith.cmpi ne, %70, %71 : vector<8x128xi32>
      %73 = arith.extui %72 : vector<8x128xi1> to vector<8x128xi32>
      %74 = arith.sitofp %73 : vector<8x128xi32> to vector<8x128xf32>
      %75 = vector.broadcast %38 : vector<1x128xf32> to vector<8x128xf32>
      %76 = arith.mulf %75, %74 : vector<8x128xf32>
      %77 = arith.addf %68, %76 : vector<8x128xf32>
      %c128_i32_50 = arith.constant 128 : i32
      %78 = vector.broadcast %c128_i32_50 : i32 to vector<8x128xi32>
      %79 = arith.andi %25, %78 : vector<8x128xi32>
      %c0_i32_51 = arith.constant 0 : i32
      %80 = vector.broadcast %c0_i32_51 : i32 to vector<8x128xi32>
      %81 = arith.cmpi ne, %79, %80 : vector<8x128xi32>
      %82 = arith.extui %81 : vector<8x128xi1> to vector<8x128xi32>
      %83 = arith.sitofp %82 : vector<8x128xi32> to vector<8x128xf32>
      %84 = vector.broadcast %39 : vector<1x128xf32> to vector<8x128xf32>
      %85 = arith.mulf %84, %83 : vector<8x128xf32>
      %86 = arith.addf %77, %85 : vector<8x128xf32>
      %c128_i32_52 = arith.constant 128 : i32
      %87 = vector.broadcast %c128_i32_52 : i32 to vector<8x128xi32>
      %88 = arith.andi %28, %87 : vector<8x128xi32>
      %c0_i32_53 = arith.constant 0 : i32
      %89 = vector.broadcast %c0_i32_53 : i32 to vector<8x128xi32>
      %90 = arith.cmpi ne, %88, %89 : vector<8x128xi32>
      %91 = arith.extui %90 : vector<8x128xi1> to vector<8x128xi32>
      %92 = arith.sitofp %91 : vector<8x128xi32> to vector<8x128xf32>
      %93 = vector.broadcast %40 : vector<1x128xf32> to vector<8x128xf32>
      %94 = arith.mulf %93, %92 : vector<8x128xf32>
      %95 = arith.addf %86, %94 : vector<8x128xf32>
      %c128_i32_54 = arith.constant 128 : i32
      %96 = vector.broadcast %c128_i32_54 : i32 to vector<8x128xi32>
      %97 = arith.andi %31, %96 : vector<8x128xi32>
      %c0_i32_55 = arith.constant 0 : i32
      %98 = vector.broadcast %c0_i32_55 : i32 to vector<8x128xi32>
      %99 = arith.cmpi ne, %97, %98 : vector<8x128xi32>
      %100 = arith.extui %99 : vector<8x128xi1> to vector<8x128xi32>
      %101 = arith.sitofp %100 : vector<8x128xi32> to vector<8x128xf32>
      %102 = vector.broadcast %41 : vector<1x128xf32> to vector<8x128xf32>
      %103 = arith.mulf %102, %101 : vector<8x128xf32>
      %104 = arith.addf %95, %103 : vector<8x128xf32>
      %c128_i32_56 = arith.constant 128 : i32
      %105 = vector.broadcast %c128_i32_56 : i32 to vector<8x128xi32>
      %106 = arith.andi %34, %105 : vector<8x128xi32>
      %c0_i32_57 = arith.constant 0 : i32
      %107 = vector.broadcast %c0_i32_57 : i32 to vector<8x128xi32>
      %108 = arith.cmpi ne, %106, %107 : vector<8x128xi32>
      %109 = arith.extui %108 : vector<8x128xi1> to vector<8x128xi32>
      %110 = arith.sitofp %109 : vector<8x128xi32> to vector<8x128xf32>
      %111 = vector.broadcast %42 : vector<1x128xf32> to vector<8x128xf32>
      %112 = arith.mulf %111, %110 : vector<8x128xf32>
      %113 = arith.addf %104, %112 : vector<8x128xf32>
      %114 = vector.broadcast %10 : vector<1x128xf32> to vector<8x128xf32>
      %115 = arith.subf %113, %114 : vector<8x128xf32>
      %c0_58 = arith.constant 0 : index
      %c0_59 = arith.constant 0 : index
      %116 = vector.load %arg8[%c0_58, %c0_59] : memref<64x128xf32, #tpu.memory_space<vmem>>, vector<8x128xf32>
      tpu.vector_store %arg8[%c0_58, %c0_59], %115 {strides = array<i32>} : memref<64x128xf32, #tpu.memory_space<vmem>>, vector<8x128xf32>,
      %c64_i32 = arith.constant 64 : i32
      %117 = vector.broadcast %c64_i32 : i32 to vector<8x128xi32>
      %118 = arith.andi %13, %117 : vector<8x128xi32>
      %c0_i32_60 = arith.constant 0 : i32
      %119 = vector.broadcast %c0_i32_60 : i32 to vector<8x128xi32>
      %120 = arith.cmpi ne, %118, %119 : vector<8x128xi32>
      %121 = arith.extui %120 : vector<8x128xi1> to vector<8x128xi32>
      %122 = arith.sitofp %121 : vector<8x128xi32> to vector<8x128xf32>
      %123 = vector.broadcast %35 : vector<1x128xf32> to vector<8x128xf32>
      %124 = arith.mulf %123, %122 : vector<8x128xf32>
      %c64_i32_61 = arith.constant 64 : i32
      %125 = vector.broadcast %c64_i32_61 : i32 to vector<8x128xi32>
      %126 = arith.andi %16, %125 : vector<8x128xi32>
      %c0_i32_62 = arith.constant 0 : i32
      %127 = vector.broadcast %c0_i32_62 : i32 to vector<8x128xi32>
      %128 = arith.cmpi ne, %126, %127 : vector<8x128xi32>
      %129 = arith.extui %128 : vector<8x128xi1> to vector<8x128xi32>
      %130 = arith.sitofp %129 : vector<8x128xi32> to vector<8x128xf32>
      %131 = vector.broadcast %36 : vector<1x128xf32> to vector<8x128xf32>
      %132 = arith.mulf %131, %130 : vector<8x128xf32>
      %133 = arith.addf %124, %132 : vector<8x128xf32>
      %c64_i32_63 = arith.constant 64 : i32
      %134 = vector.broadcast %c64_i32_63 : i32 to vector<8x128xi32>
      %135 = arith.andi %19, %134 : vector<8x128xi32>
      %c0_i32_64 = arith.constant 0 : i32
      %136 = vector.broadcast %c0_i32_64 : i32 to vector<8x128xi32>
      %137 = arith.cmpi ne, %135, %136 : vector<8x128xi32>
      %138 = arith.extui %137 : vector<8x128xi1> to vector<8x128xi32>
      %139 = arith.sitofp %138 : vector<8x128xi32> to vector<8x128xf32>
      %140 = vector.broadcast %37 : vector<1x128xf32> to vector<8x128xf32>
      %141 = arith.mulf %140, %139 : vector<8x128xf32>
      %142 = arith.addf %133, %141 : vector<8x128xf32>
      %c64_i32_65 = arith.constant 64 : i32
      %143 = vector.broadcast %c64_i32_65 : i32 to vector<8x128xi32>
      %144 = arith.andi %22, %143 : vector<8x128xi32>
      %c0_i32_66 = arith.constant 0 : i32
      %145 = vector.broadcast %c0_i32_66 : i32 to vector<8x128xi32>
      %146 = arith.cmpi ne, %144, %145 : vector<8x128xi32>
      %147 = arith.extui %146 : vector<8x128xi1> to vector<8x128xi32>
      %148 = arith.sitofp %147 : vector<8x128xi32> to vector<8x128xf32>
      %149 = vector.broadcast %38 : vector<1x128xf32> to vector<8x128xf32>
      %150 = arith.mulf %149, %148 : vector<8x128xf32>
      %151 = arith.addf %142, %150 : vector<8x128xf32>
      %c64_i32_67 = arith.constant 64 : i32
      %152 = vector.broadcast %c64_i32_67 : i32 to vector<8x128xi32>
      %153 = arith.andi %25, %152 : vector<8x128xi32>
      %c0_i32_68 = arith.constant 0 : i32
      %154 = vector.broadcast %c0_i32_68 : i32 to vector<8x128xi32>
      %155 = arith.cmpi ne, %153, %154 : vector<8x128xi32>
      %156 = arith.extui %155 : vector<8x128xi1> to vector<8x128xi32>
      %157 = arith.sitofp %156 : vector<8x128xi32> to vector<8x128xf32>
      %158 = vector.broadcast %39 : vector<1x128xf32> to vector<8x128xf32>
      %159 = arith.mulf %158, %157 : vector<8x128xf32>
      %160 = arith.addf %151, %159 : vector<8x128xf32>
      %c64_i32_69 = arith.constant 64 : i32
      %161 = vector.broadcast %c64_i32_69 : i32 to vector<8x128xi32>
      %162 = arith.andi %28, %161 : vector<8x128xi32>
      %c0_i32_70 = arith.constant 0 : i32
      %163 = vector.broadcast %c0_i32_70 : i32 to vector<8x128xi32>
      %164 = arith.cmpi ne, %162, %163 : vector<8x128xi32>
      %165 = arith.extui %164 : vector<8x128xi1> to vector<8x128xi32>
      %166 = arith.sitofp %165 : vector<8x128xi32> to vector<8x128xf32>
      %167 = vector.broadcast %40 : vector<1x128xf32> to vector<8x128xf32>
      %168 = arith.mulf %167, %166 : vector<8x128xf32>
      %169 = arith.addf %160, %168 : vector<8x128xf32>
      %c64_i32_71 = arith.constant 64 : i32
      %170 = vector.broadcast %c64_i32_71 : i32 to vector<8x128xi32>
      %171 = arith.andi %31, %170 : vector<8x128xi32>
      %c0_i32_72 = arith.constant 0 : i32
      %172 = vector.broadcast %c0_i32_72 : i32 to vector<8x128xi32>
      %173 = arith.cmpi ne, %171, %172 : vector<8x128xi32>
      %174 = arith.extui %173 : vector<8x128xi1> to vector<8x128xi32>
      %175 = arith.sitofp %174 : vector<8x128xi32> to vector<8x128xf32>
      %176 = vector.broadcast %41 : vector<1x128xf32> to vector<8x128xf32>
      %177 = arith.mulf %176, %175 : vector<8x128xf32>
      %178 = arith.addf %169, %177 : vector<8x128xf32>
      %c64_i32_73 = arith.constant 64 : i32
      %179 = vector.broadcast %c64_i32_73 : i32 to vector<8x128xi32>
      %180 = arith.andi %34, %179 : vector<8x128xi32>
      %c0_i32_74 = arith.constant 0 : i32
      %181 = vector.broadcast %c0_i32_74 : i32 to vector<8x128xi32>
      %182 = arith.cmpi ne, %180, %181 : vector<8x128xi32>
      %183 = arith.extui %182 : vector<8x128xi1> to vector<8x128xi32>
      %184 = arith.sitofp %183 : vector<8x128xi32> to vector<8x128xf32>
      %185 = vector.broadcast %42 : vector<1x128xf32> to vector<8x128xf32>
      %186 = arith.mulf %185, %184 : vector<8x128xf32>
      %187 = arith.addf %178, %186 : vector<8x128xf32>
      %188 = vector.broadcast %10 : vector<1x128xf32> to vector<8x128xf32>
      %189 = arith.subf %187, %188 : vector<8x128xf32>
      %c8 = arith.constant 8 : index
      %c0_75 = arith.constant 0 : index
      %190 = vector.load %arg8[%c8, %c0_75] : memref<64x128xf32, #tpu.memory_space<vmem>>, vector<8x128xf32>
      tpu.vector_store %arg8[%c8, %c0_75], %189 {strides = array<i32>} : memref<64x128xf32, #tpu.memory_space<vmem>>, vector<8x128xf32>,
      %c32_i32 = arith.constant 32 : i32
      %191 = vector.broadcast %c32_i32 : i32 to vector<8x128xi32>
      %192 = arith.andi %13, %191 : vector<8x128xi32>
      %c0_i32_76 = arith.constant 0 : i32
      %193 = vector.broadcast %c0_i32_76 : i32 to vector<8x128xi32>
      %194 = arith.cmpi ne, %192, %193 : vector<8x128xi32>
      %195 = arith.extui %194 : vector<8x128xi1> to vector<8x128xi32>
      %196 = arith.sitofp %195 : vector<8x128xi32> to vector<8x128xf32>
      %197 = vector.broadcast %35 : vector<1x128xf32> to vector<8x128xf32>
      %198 = arith.mulf %197, %196 : vector<8x128xf32>
      %c32_i32_77 = arith.constant 32 : i32
      %199 = vector.broadcast %c32_i32_77 : i32 to vector<8x128xi32>
      %200 = arith.andi %16, %199 : vector<8x128xi32>
      %c0_i32_78 = arith.constant 0 : i32
      %201 = vector.broadcast %c0_i32_78 : i32 to vector<8x128xi32>
      %202 = arith.cmpi ne, %200, %201 : vector<8x128xi32>
      %203 = arith.extui %202 : vector<8x128xi1> to vector<8x128xi32>
      %204 = arith.sitofp %203 : vector<8x128xi32> to vector<8x128xf32>
      %205 = vector.broadcast %36 : vector<1x128xf32> to vector<8x128xf32>
      %206 = arith.mulf %205, %204 : vector<8x128xf32>
      %207 = arith.addf %198, %206 : vector<8x128xf32>
      %c32_i32_79 = arith.constant 32 : i32
      %208 = vector.broadcast %c32_i32_79 : i32 to vector<8x128xi32>
      %209 = arith.andi %19, %208 : vector<8x128xi32>
      %c0_i32_80 = arith.constant 0 : i32
      %210 = vector.broadcast %c0_i32_80 : i32 to vector<8x128xi32>
      %211 = arith.cmpi ne, %209, %210 : vector<8x128xi32>
      %212 = arith.extui %211 : vector<8x128xi1> to vector<8x128xi32>
      %213 = arith.sitofp %212 : vector<8x128xi32> to vector<8x128xf32>
      %214 = vector.broadcast %37 : vector<1x128xf32> to vector<8x128xf32>
      %215 = arith.mulf %214, %213 : vector<8x128xf32>
      %216 = arith.addf %207, %215 : vector<8x128xf32>
      %c32_i32_81 = arith.constant 32 : i32
      %217 = vector.broadcast %c32_i32_81 : i32 to vector<8x128xi32>
      %218 = arith.andi %22, %217 : vector<8x128xi32>
      %c0_i32_82 = arith.constant 0 : i32
      %219 = vector.broadcast %c0_i32_82 : i32 to vector<8x128xi32>
      %220 = arith.cmpi ne, %218, %219 : vector<8x128xi32>
      %221 = arith.extui %220 : vector<8x128xi1> to vector<8x128xi32>
      %222 = arith.sitofp %221 : vector<8x128xi32> to vector<8x128xf32>
      %223 = vector.broadcast %38 : vector<1x128xf32> to vector<8x128xf32>
      %224 = arith.mulf %223, %222 : vector<8x128xf32>
      %225 = arith.addf %216, %224 : vector<8x128xf32>
      %c32_i32_83 = arith.constant 32 : i32
      %226 = vector.broadcast %c32_i32_83 : i32 to vector<8x128xi32>
      %227 = arith.andi %25, %226 : vector<8x128xi32>
      %c0_i32_84 = arith.constant 0 : i32
      %228 = vector.broadcast %c0_i32_84 : i32 to vector<8x128xi32>
      %229 = arith.cmpi ne, %227, %228 : vector<8x128xi32>
      %230 = arith.extui %229 : vector<8x128xi1> to vector<8x128xi32>
      %231 = arith.sitofp %230 : vector<8x128xi32> to vector<8x128xf32>
      %232 = vector.broadcast %39 : vector<1x128xf32> to vector<8x128xf32>
      %233 = arith.mulf %232, %231 : vector<8x128xf32>
      %234 = arith.addf %225, %233 : vector<8x128xf32>
      %c32_i32_85 = arith.constant 32 : i32
      %235 = vector.broadcast %c32_i32_85 : i32 to vector<8x128xi32>
      %236 = arith.andi %28, %235 : vector<8x128xi32>
      %c0_i32_86 = arith.constant 0 : i32
      %237 = vector.broadcast %c0_i32_86 : i32 to vector<8x128xi32>
      %238 = arith.cmpi ne, %236, %237 : vector<8x128xi32>
      %239 = arith.extui %238 : vector<8x128xi1> to vector<8x128xi32>
      %240 = arith.sitofp %239 : vector<8x128xi32> to vector<8x128xf32>
      %241 = vector.broadcast %40 : vector<1x128xf32> to vector<8x128xf32>
      %242 = arith.mulf %241, %240 : vector<8x128xf32>
      %243 = arith.addf %234, %242 : vector<8x128xf32>
      %c32_i32_87 = arith.constant 32 : i32
      %244 = vector.broadcast %c32_i32_87 : i32 to vector<8x128xi32>
      %245 = arith.andi %31, %244 : vector<8x128xi32>
      %c0_i32_88 = arith.constant 0 : i32
      %246 = vector.broadcast %c0_i32_88 : i32 to vector<8x128xi32>
      %247 = arith.cmpi ne, %245, %246 : vector<8x128xi32>
      %248 = arith.extui %247 : vector<8x128xi1> to vector<8x128xi32>
      %249 = arith.sitofp %248 : vector<8x128xi32> to vector<8x128xf32>
      %250 = vector.broadcast %41 : vector<1x128xf32> to vector<8x128xf32>
      %251 = arith.mulf %250, %249 : vector<8x128xf32>
      %252 = arith.addf %243, %251 : vector<8x128xf32>
      %c32_i32_89 = arith.constant 32 : i32
      %253 = vector.broadcast %c32_i32_89 : i32 to vector<8x128xi32>
      %254 = arith.andi %34, %253 : vector<8x128xi32>
      %c0_i32_90 = arith.constant 0 : i32
      %255 = vector.broadcast %c0_i32_90 : i32 to vector<8x128xi32>
      %256 = arith.cmpi ne, %254, %255 : vector<8x128xi32>
      %257 = arith.extui %256 : vector<8x128xi1> to vector<8x128xi32>
      %258 = arith.sitofp %257 : vector<8x128xi32> to vector<8x128xf32>
      %259 = vector.broadcast %42 : vector<1x128xf32> to vector<8x128xf32>
      %260 = arith.mulf %259, %258 : vector<8x128xf32>
      %261 = arith.addf %252, %260 : vector<8x128xf32>
      %262 = vector.broadcast %10 : vector<1x128xf32> to vector<8x128xf32>
      %263 = arith.subf %261, %262 : vector<8x128xf32>
      %c16 = arith.constant 16 : index
      %c0_91 = arith.constant 0 : index
      %264 = vector.load %arg8[%c16, %c0_91] : memref<64x128xf32, #tpu.memory_space<vmem>>, vector<8x128xf32>
      tpu.vector_store %arg8[%c16, %c0_91], %263 {strides = array<i32>} : memref<64x128xf32, #tpu.memory_space<vmem>>, vector<8x128xf32>,
      %c16_i32 = arith.constant 16 : i32
      %265 = vector.broadcast %c16_i32 : i32 to vector<8x128xi32>
      %266 = arith.andi %13, %265 : vector<8x128xi32>
      %c0_i32_92 = arith.constant 0 : i32
      %267 = vector.broadcast %c0_i32_92 : i32 to vector<8x128xi32>
      %268 = arith.cmpi ne, %266, %267 : vector<8x128xi32>
      %269 = arith.extui %268 : vector<8x128xi1> to vector<8x128xi32>
      %270 = arith.sitofp %269 : vector<8x128xi32> to vector<8x128xf32>
      %271 = vector.broadcast %35 : vector<1x128xf32> to vector<8x128xf32>
      %272 = arith.mulf %271, %270 : vector<8x128xf32>
      %c16_i32_93 = arith.constant 16 : i32
      %273 = vector.broadcast %c16_i32_93 : i32 to vector<8x128xi32>
      %274 = arith.andi %16, %273 : vector<8x128xi32>
      %c0_i32_94 = arith.constant 0 : i32
      %275 = vector.broadcast %c0_i32_94 : i32 to vector<8x128xi32>
      %276 = arith.cmpi ne, %274, %275 : vector<8x128xi32>
      %277 = arith.extui %276 : vector<8x128xi1> to vector<8x128xi32>
      %278 = arith.sitofp %277 : vector<8x128xi32> to vector<8x128xf32>
      %279 = vector.broadcast %36 : vector<1x128xf32> to vector<8x128xf32>
      %280 = arith.mulf %279, %278 : vector<8x128xf32>
      %281 = arith.addf %272, %280 : vector<8x128xf32>
      %c16_i32_95 = arith.constant 16 : i32
      %282 = vector.broadcast %c16_i32_95 : i32 to vector<8x128xi32>
      %283 = arith.andi %19, %282 : vector<8x128xi32>
      %c0_i32_96 = arith.constant 0 : i32
      %284 = vector.broadcast %c0_i32_96 : i32 to vector<8x128xi32>
      %285 = arith.cmpi ne, %283, %284 : vector<8x128xi32>
      %286 = arith.extui %285 : vector<8x128xi1> to vector<8x128xi32>
      %287 = arith.sitofp %286 : vector<8x128xi32> to vector<8x128xf32>
      %288 = vector.broadcast %37 : vector<1x128xf32> to vector<8x128xf32>
      %289 = arith.mulf %288, %287 : vector<8x128xf32>
      %290 = arith.addf %281, %289 : vector<8x128xf32>
      %c16_i32_97 = arith.constant 16 : i32
      %291 = vector.broadcast %c16_i32_97 : i32 to vector<8x128xi32>
      %292 = arith.andi %22, %291 : vector<8x128xi32>
      %c0_i32_98 = arith.constant 0 : i32
      %293 = vector.broadcast %c0_i32_98 : i32 to vector<8x128xi32>
      %294 = arith.cmpi ne, %292, %293 : vector<8x128xi32>
      %295 = arith.extui %294 : vector<8x128xi1> to vector<8x128xi32>
      %296 = arith.sitofp %295 : vector<8x128xi32> to vector<8x128xf32>
      %297 = vector.broadcast %38 : vector<1x128xf32> to vector<8x128xf32>
      %298 = arith.mulf %297, %296 : vector<8x128xf32>
      %299 = arith.addf %290, %298 : vector<8x128xf32>
      %c16_i32_99 = arith.constant 16 : i32
      %300 = vector.broadcast %c16_i32_99 : i32 to vector<8x128xi32>
      %301 = arith.andi %25, %300 : vector<8x128xi32>
      %c0_i32_100 = arith.constant 0 : i32
      %302 = vector.broadcast %c0_i32_100 : i32 to vector<8x128xi32>
      %303 = arith.cmpi ne, %301, %302 : vector<8x128xi32>
      %304 = arith.extui %303 : vector<8x128xi1> to vector<8x128xi32>
      %305 = arith.sitofp %304 : vector<8x128xi32> to vector<8x128xf32>
      %306 = vector.broadcast %39 : vector<1x128xf32> to vector<8x128xf32>
      %307 = arith.mulf %306, %305 : vector<8x128xf32>
      %308 = arith.addf %299, %307 : vector<8x128xf32>
      %c16_i32_101 = arith.constant 16 : i32
      %309 = vector.broadcast %c16_i32_101 : i32 to vector<8x128xi32>
      %310 = arith.andi %28, %309 : vector<8x128xi32>
      %c0_i32_102 = arith.constant 0 : i32
      %311 = vector.broadcast %c0_i32_102 : i32 to vector<8x128xi32>
      %312 = arith.cmpi ne, %310, %311 : vector<8x128xi32>
      %313 = arith.extui %312 : vector<8x128xi1> to vector<8x128xi32>
      %314 = arith.sitofp %313 : vector<8x128xi32> to vector<8x128xf32>
      %315 = vector.broadcast %40 : vector<1x128xf32> to vector<8x128xf32>
      %316 = arith.mulf %315, %314 : vector<8x128xf32>
      %317 = arith.addf %308, %316 : vector<8x128xf32>
      %c16_i32_103 = arith.constant 16 : i32
      %318 = vector.broadcast %c16_i32_103 : i32 to vector<8x128xi32>
      %319 = arith.andi %31, %318 : vector<8x128xi32>
      %c0_i32_104 = arith.constant 0 : i32
      %320 = vector.broadcast %c0_i32_104 : i32 to vector<8x128xi32>
      %321 = arith.cmpi ne, %319, %320 : vector<8x128xi32>
      %322 = arith.extui %321 : vector<8x128xi1> to vector<8x128xi32>
      %323 = arith.sitofp %322 : vector<8x128xi32> to vector<8x128xf32>
      %324 = vector.broadcast %41 : vector<1x128xf32> to vector<8x128xf32>
      %325 = arith.mulf %324, %323 : vector<8x128xf32>
      %326 = arith.addf %317, %325 : vector<8x128xf32>
      %c16_i32_105 = arith.constant 16 : i32
      %327 = vector.broadcast %c16_i32_105 : i32 to vector<8x128xi32>
      %328 = arith.andi %34, %327 : vector<8x128xi32>
      %c0_i32_106 = arith.constant 0 : i32
      %329 = vector.broadcast %c0_i32_106 : i32 to vector<8x128xi32>
      %330 = arith.cmpi ne, %328, %329 : vector<8x128xi32>
      %331 = arith.extui %330 : vector<8x128xi1> to vector<8x128xi32>
      %332 = arith.sitofp %331 : vector<8x128xi32> to vector<8x128xf32>
      %333 = vector.broadcast %42 : vector<1x128xf32> to vector<8x128xf32>
      %334 = arith.mulf %333, %332 : vector<8x128xf32>
      %335 = arith.addf %326, %334 : vector<8x128xf32>
      %336 = vector.broadcast %10 : vector<1x128xf32> to vector<8x128xf32>
      %337 = arith.subf %335, %336 : vector<8x128xf32>
      %c24 = arith.constant 24 : index
      %c0_107 = arith.constant 0 : index
      %338 = vector.load %arg8[%c24, %c0_107] : memref<64x128xf32, #tpu.memory_space<vmem>>, vector<8x128xf32>
      tpu.vector_store %arg8[%c24, %c0_107], %337 {strides = array<i32>} : memref<64x128xf32, #tpu.memory_space<vmem>>, vector<8x128xf32>,
      %c8_i32 = arith.constant 8 : i32
      %339 = vector.broadcast %c8_i32 : i32 to vector<8x128xi32>
      %340 = arith.andi %13, %339 : vector<8x128xi32>
      %c0_i32_108 = arith.constant 0 : i32
      %341 = vector.broadcast %c0_i32_108 : i32 to vector<8x128xi32>
      %342 = arith.cmpi ne, %340, %341 : vector<8x128xi32>
      %343 = arith.extui %342 : vector<8x128xi1> to vector<8x128xi32>
      %344 = arith.sitofp %343 : vector<8x128xi32> to vector<8x128xf32>
      %345 = vector.broadcast %35 : vector<1x128xf32> to vector<8x128xf32>
      %346 = arith.mulf %345, %344 : vector<8x128xf32>
      %c8_i32_109 = arith.constant 8 : i32
      %347 = vector.broadcast %c8_i32_109 : i32 to vector<8x128xi32>
      %348 = arith.andi %16, %347 : vector<8x128xi32>
      %c0_i32_110 = arith.constant 0 : i32
      %349 = vector.broadcast %c0_i32_110 : i32 to vector<8x128xi32>
      %350 = arith.cmpi ne, %348, %349 : vector<8x128xi32>
      %351 = arith.extui %350 : vector<8x128xi1> to vector<8x128xi32>
      %352 = arith.sitofp %351 : vector<8x128xi32> to vector<8x128xf32>
      %353 = vector.broadcast %36 : vector<1x128xf32> to vector<8x128xf32>
      %354 = arith.mulf %353, %352 : vector<8x128xf32>
      %355 = arith.addf %346, %354 : vector<8x128xf32>
      %c8_i32_111 = arith.constant 8 : i32
      %356 = vector.broadcast %c8_i32_111 : i32 to vector<8x128xi32>
      %357 = arith.andi %19, %356 : vector<8x128xi32>
      %c0_i32_112 = arith.constant 0 : i32
      %358 = vector.broadcast %c0_i32_112 : i32 to vector<8x128xi32>
      %359 = arith.cmpi ne, %357, %358 : vector<8x128xi32>
      %360 = arith.extui %359 : vector<8x128xi1> to vector<8x128xi32>
      %361 = arith.sitofp %360 : vector<8x128xi32> to vector<8x128xf32>
      %362 = vector.broadcast %37 : vector<1x128xf32> to vector<8x128xf32>
      %363 = arith.mulf %362, %361 : vector<8x128xf32>
      %364 = arith.addf %355, %363 : vector<8x128xf32>
      %c8_i32_113 = arith.constant 8 : i32
      %365 = vector.broadcast %c8_i32_113 : i32 to vector<8x128xi32>
      %366 = arith.andi %22, %365 : vector<8x128xi32>
      %c0_i32_114 = arith.constant 0 : i32
      %367 = vector.broadcast %c0_i32_114 : i32 to vector<8x128xi32>
      %368 = arith.cmpi ne, %366, %367 : vector<8x128xi32>
      %369 = arith.extui %368 : vector<8x128xi1> to vector<8x128xi32>
      %370 = arith.sitofp %369 : vector<8x128xi32> to vector<8x128xf32>
      %371 = vector.broadcast %38 : vector<1x128xf32> to vector<8x128xf32>
      %372 = arith.mulf %371, %370 : vector<8x128xf32>
      %373 = arith.addf %364, %372 : vector<8x128xf32>
      %c8_i32_115 = arith.constant 8 : i32
      %374 = vector.broadcast %c8_i32_115 : i32 to vector<8x128xi32>
      %375 = arith.andi %25, %374 : vector<8x128xi32>
      %c0_i32_116 = arith.constant 0 : i32
      %376 = vector.broadcast %c0_i32_116 : i32 to vector<8x128xi32>
      %377 = arith.cmpi ne, %375, %376 : vector<8x128xi32>
      %378 = arith.extui %377 : vector<8x128xi1> to vector<8x128xi32>
      %379 = arith.sitofp %378 : vector<8x128xi32> to vector<8x128xf32>
      %380 = vector.broadcast %39 : vector<1x128xf32> to vector<8x128xf32>
      %381 = arith.mulf %380, %379 : vector<8x128xf32>
      %382 = arith.addf %373, %381 : vector<8x128xf32>
      %c8_i32_117 = arith.constant 8 : i32
      %383 = vector.broadcast %c8_i32_117 : i32 to vector<8x128xi32>
      %384 = arith.andi %28, %383 : vector<8x128xi32>
      %c0_i32_118 = arith.constant 0 : i32
      %385 = vector.broadcast %c0_i32_118 : i32 to vector<8x128xi32>
      %386 = arith.cmpi ne, %384, %385 : vector<8x128xi32>
      %387 = arith.extui %386 : vector<8x128xi1> to vector<8x128xi32>
      %388 = arith.sitofp %387 : vector<8x128xi32> to vector<8x128xf32>
      %389 = vector.broadcast %40 : vector<1x128xf32> to vector<8x128xf32>
      %390 = arith.mulf %389, %388 : vector<8x128xf32>
      %391 = arith.addf %382, %390 : vector<8x128xf32>
      %c8_i32_119 = arith.constant 8 : i32
      %392 = vector.broadcast %c8_i32_119 : i32 to vector<8x128xi32>
      %393 = arith.andi %31, %392 : vector<8x128xi32>
      %c0_i32_120 = arith.constant 0 : i32
      %394 = vector.broadcast %c0_i32_120 : i32 to vector<8x128xi32>
      %395 = arith.cmpi ne, %393, %394 : vector<8x128xi32>
      %396 = arith.extui %395 : vector<8x128xi1> to vector<8x128xi32>
      %397 = arith.sitofp %396 : vector<8x128xi32> to vector<8x128xf32>
      %398 = vector.broadcast %41 : vector<1x128xf32> to vector<8x128xf32>
      %399 = arith.mulf %398, %397 : vector<8x128xf32>
      %400 = arith.addf %391, %399 : vector<8x128xf32>
      %c8_i32_121 = arith.constant 8 : i32
      %401 = vector.broadcast %c8_i32_121 : i32 to vector<8x128xi32>
      %402 = arith.andi %34, %401 : vector<8x128xi32>
      %c0_i32_122 = arith.constant 0 : i32
      %403 = vector.broadcast %c0_i32_122 : i32 to vector<8x128xi32>
      %404 = arith.cmpi ne, %402, %403 : vector<8x128xi32>
      %405 = arith.extui %404 : vector<8x128xi1> to vector<8x128xi32>
      %406 = arith.sitofp %405 : vector<8x128xi32> to vector<8x128xf32>
      %407 = vector.broadcast %42 : vector<1x128xf32> to vector<8x128xf32>
      %408 = arith.mulf %407, %406 : vector<8x128xf32>
      %409 = arith.addf %400, %408 : vector<8x128xf32>
      %410 = vector.broadcast %10 : vector<1x128xf32> to vector<8x128xf32>
      %411 = arith.subf %409, %410 : vector<8x128xf32>
      %c32 = arith.constant 32 : index
      %c0_123 = arith.constant 0 : index
      %412 = vector.load %arg8[%c32, %c0_123] : memref<64x128xf32, #tpu.memory_space<vmem>>, vector<8x128xf32>
      tpu.vector_store %arg8[%c32, %c0_123], %411 {strides = array<i32>} : memref<64x128xf32, #tpu.memory_space<vmem>>, vector<8x128xf32>,
      %c4_i32 = arith.constant 4 : i32
      %413 = vector.broadcast %c4_i32 : i32 to vector<8x128xi32>
      %414 = arith.andi %13, %413 : vector<8x128xi32>
      %c0_i32_124 = arith.constant 0 : i32
      %415 = vector.broadcast %c0_i32_124 : i32 to vector<8x128xi32>
      %416 = arith.cmpi ne, %414, %415 : vector<8x128xi32>
      %417 = arith.extui %416 : vector<8x128xi1> to vector<8x128xi32>
      %418 = arith.sitofp %417 : vector<8x128xi32> to vector<8x128xf32>
      %419 = vector.broadcast %35 : vector<1x128xf32> to vector<8x128xf32>
      %420 = arith.mulf %419, %418 : vector<8x128xf32>
      %c4_i32_125 = arith.constant 4 : i32
      %421 = vector.broadcast %c4_i32_125 : i32 to vector<8x128xi32>
      %422 = arith.andi %16, %421 : vector<8x128xi32>
      %c0_i32_126 = arith.constant 0 : i32
      %423 = vector.broadcast %c0_i32_126 : i32 to vector<8x128xi32>
      %424 = arith.cmpi ne, %422, %423 : vector<8x128xi32>
      %425 = arith.extui %424 : vector<8x128xi1> to vector<8x128xi32>
      %426 = arith.sitofp %425 : vector<8x128xi32> to vector<8x128xf32>
      %427 = vector.broadcast %36 : vector<1x128xf32> to vector<8x128xf32>
      %428 = arith.mulf %427, %426 : vector<8x128xf32>
      %429 = arith.addf %420, %428 : vector<8x128xf32>
      %c4_i32_127 = arith.constant 4 : i32
      %430 = vector.broadcast %c4_i32_127 : i32 to vector<8x128xi32>
      %431 = arith.andi %19, %430 : vector<8x128xi32>
      %c0_i32_128 = arith.constant 0 : i32
      %432 = vector.broadcast %c0_i32_128 : i32 to vector<8x128xi32>
      %433 = arith.cmpi ne, %431, %432 : vector<8x128xi32>
      %434 = arith.extui %433 : vector<8x128xi1> to vector<8x128xi32>
      %435 = arith.sitofp %434 : vector<8x128xi32> to vector<8x128xf32>
      %436 = vector.broadcast %37 : vector<1x128xf32> to vector<8x128xf32>
      %437 = arith.mulf %436, %435 : vector<8x128xf32>
      %438 = arith.addf %429, %437 : vector<8x128xf32>
      %c4_i32_129 = arith.constant 4 : i32
      %439 = vector.broadcast %c4_i32_129 : i32 to vector<8x128xi32>
      %440 = arith.andi %22, %439 : vector<8x128xi32>
      %c0_i32_130 = arith.constant 0 : i32
      %441 = vector.broadcast %c0_i32_130 : i32 to vector<8x128xi32>
      %442 = arith.cmpi ne, %440, %441 : vector<8x128xi32>
      %443 = arith.extui %442 : vector<8x128xi1> to vector<8x128xi32>
      %444 = arith.sitofp %443 : vector<8x128xi32> to vector<8x128xf32>
      %445 = vector.broadcast %38 : vector<1x128xf32> to vector<8x128xf32>
      %446 = arith.mulf %445, %444 : vector<8x128xf32>
      %447 = arith.addf %438, %446 : vector<8x128xf32>
      %c4_i32_131 = arith.constant 4 : i32
      %448 = vector.broadcast %c4_i32_131 : i32 to vector<8x128xi32>
      %449 = arith.andi %25, %448 : vector<8x128xi32>
      %c0_i32_132 = arith.constant 0 : i32
      %450 = vector.broadcast %c0_i32_132 : i32 to vector<8x128xi32>
      %451 = arith.cmpi ne, %449, %450 : vector<8x128xi32>
      %452 = arith.extui %451 : vector<8x128xi1> to vector<8x128xi32>
      %453 = arith.sitofp %452 : vector<8x128xi32> to vector<8x128xf32>
      %454 = vector.broadcast %39 : vector<1x128xf32> to vector<8x128xf32>
      %455 = arith.mulf %454, %453 : vector<8x128xf32>
      %456 = arith.addf %447, %455 : vector<8x128xf32>
      %c4_i32_133 = arith.constant 4 : i32
      %457 = vector.broadcast %c4_i32_133 : i32 to vector<8x128xi32>
      %458 = arith.andi %28, %457 : vector<8x128xi32>
      %c0_i32_134 = arith.constant 0 : i32
      %459 = vector.broadcast %c0_i32_134 : i32 to vector<8x128xi32>
      %460 = arith.cmpi ne, %458, %459 : vector<8x128xi32>
      %461 = arith.extui %460 : vector<8x128xi1> to vector<8x128xi32>
      %462 = arith.sitofp %461 : vector<8x128xi32> to vector<8x128xf32>
      %463 = vector.broadcast %40 : vector<1x128xf32> to vector<8x128xf32>
      %464 = arith.mulf %463, %462 : vector<8x128xf32>
      %465 = arith.addf %456, %464 : vector<8x128xf32>
      %c4_i32_135 = arith.constant 4 : i32
      %466 = vector.broadcast %c4_i32_135 : i32 to vector<8x128xi32>
      %467 = arith.andi %31, %466 : vector<8x128xi32>
      %c0_i32_136 = arith.constant 0 : i32
      %468 = vector.broadcast %c0_i32_136 : i32 to vector<8x128xi32>
      %469 = arith.cmpi ne, %467, %468 : vector<8x128xi32>
      %470 = arith.extui %469 : vector<8x128xi1> to vector<8x128xi32>
      %471 = arith.sitofp %470 : vector<8x128xi32> to vector<8x128xf32>
      %472 = vector.broadcast %41 : vector<1x128xf32> to vector<8x128xf32>
      %473 = arith.mulf %472, %471 : vector<8x128xf32>
      %474 = arith.addf %465, %473 : vector<8x128xf32>
      %c4_i32_137 = arith.constant 4 : i32
      %475 = vector.broadcast %c4_i32_137 : i32 to vector<8x128xi32>
      %476 = arith.andi %34, %475 : vector<8x128xi32>
      %c0_i32_138 = arith.constant 0 : i32
      %477 = vector.broadcast %c0_i32_138 : i32 to vector<8x128xi32>
      %478 = arith.cmpi ne, %476, %477 : vector<8x128xi32>
      %479 = arith.extui %478 : vector<8x128xi1> to vector<8x128xi32>
      %480 = arith.sitofp %479 : vector<8x128xi32> to vector<8x128xf32>
      %481 = vector.broadcast %42 : vector<1x128xf32> to vector<8x128xf32>
      %482 = arith.mulf %481, %480 : vector<8x128xf32>
      %483 = arith.addf %474, %482 : vector<8x128xf32>
      %484 = vector.broadcast %10 : vector<1x128xf32> to vector<8x128xf32>
      %485 = arith.subf %483, %484 : vector<8x128xf32>
      %c40 = arith.constant 40 : index
      %c0_139 = arith.constant 0 : index
      %486 = vector.load %arg8[%c40, %c0_139] : memref<64x128xf32, #tpu.memory_space<vmem>>, vector<8x128xf32>
      tpu.vector_store %arg8[%c40, %c0_139], %485 {strides = array<i32>} : memref<64x128xf32, #tpu.memory_space<vmem>>, vector<8x128xf32>,
      %c2_i32 = arith.constant 2 : i32
      %487 = vector.broadcast %c2_i32 : i32 to vector<8x128xi32>
      %488 = arith.andi %13, %487 : vector<8x128xi32>
      %c0_i32_140 = arith.constant 0 : i32
      %489 = vector.broadcast %c0_i32_140 : i32 to vector<8x128xi32>
      %490 = arith.cmpi ne, %488, %489 : vector<8x128xi32>
      %491 = arith.extui %490 : vector<8x128xi1> to vector<8x128xi32>
      %492 = arith.sitofp %491 : vector<8x128xi32> to vector<8x128xf32>
      %493 = vector.broadcast %35 : vector<1x128xf32> to vector<8x128xf32>
      %494 = arith.mulf %493, %492 : vector<8x128xf32>
      %c2_i32_141 = arith.constant 2 : i32
      %495 = vector.broadcast %c2_i32_141 : i32 to vector<8x128xi32>
      %496 = arith.andi %16, %495 : vector<8x128xi32>
      %c0_i32_142 = arith.constant 0 : i32
      %497 = vector.broadcast %c0_i32_142 : i32 to vector<8x128xi32>
      %498 = arith.cmpi ne, %496, %497 : vector<8x128xi32>
      %499 = arith.extui %498 : vector<8x128xi1> to vector<8x128xi32>
      %500 = arith.sitofp %499 : vector<8x128xi32> to vector<8x128xf32>
      %501 = vector.broadcast %36 : vector<1x128xf32> to vector<8x128xf32>
      %502 = arith.mulf %501, %500 : vector<8x128xf32>
      %503 = arith.addf %494, %502 : vector<8x128xf32>
      %c2_i32_143 = arith.constant 2 : i32
      %504 = vector.broadcast %c2_i32_143 : i32 to vector<8x128xi32>
      %505 = arith.andi %19, %504 : vector<8x128xi32>
      %c0_i32_144 = arith.constant 0 : i32
      %506 = vector.broadcast %c0_i32_144 : i32 to vector<8x128xi32>
      %507 = arith.cmpi ne, %505, %506 : vector<8x128xi32>
      %508 = arith.extui %507 : vector<8x128xi1> to vector<8x128xi32>
      %509 = arith.sitofp %508 : vector<8x128xi32> to vector<8x128xf32>
      %510 = vector.broadcast %37 : vector<1x128xf32> to vector<8x128xf32>
      %511 = arith.mulf %510, %509 : vector<8x128xf32>
      %512 = arith.addf %503, %511 : vector<8x128xf32>
      %c2_i32_145 = arith.constant 2 : i32
      %513 = vector.broadcast %c2_i32_145 : i32 to vector<8x128xi32>
      %514 = arith.andi %22, %513 : vector<8x128xi32>
      %c0_i32_146 = arith.constant 0 : i32
      %515 = vector.broadcast %c0_i32_146 : i32 to vector<8x128xi32>
      %516 = arith.cmpi ne, %514, %515 : vector<8x128xi32>
      %517 = arith.extui %516 : vector<8x128xi1> to vector<8x128xi32>
      %518 = arith.sitofp %517 : vector<8x128xi32> to vector<8x128xf32>
      %519 = vector.broadcast %38 : vector<1x128xf32> to vector<8x128xf32>
      %520 = arith.mulf %519, %518 : vector<8x128xf32>
      %521 = arith.addf %512, %520 : vector<8x128xf32>
      %c2_i32_147 = arith.constant 2 : i32
      %522 = vector.broadcast %c2_i32_147 : i32 to vector<8x128xi32>
      %523 = arith.andi %25, %522 : vector<8x128xi32>
      %c0_i32_148 = arith.constant 0 : i32
      %524 = vector.broadcast %c0_i32_148 : i32 to vector<8x128xi32>
      %525 = arith.cmpi ne, %523, %524 : vector<8x128xi32>
      %526 = arith.extui %525 : vector<8x128xi1> to vector<8x128xi32>
      %527 = arith.sitofp %526 : vector<8x128xi32> to vector<8x128xf32>
      %528 = vector.broadcast %39 : vector<1x128xf32> to vector<8x128xf32>
      %529 = arith.mulf %528, %527 : vector<8x128xf32>
      %530 = arith.addf %521, %529 : vector<8x128xf32>
      %c2_i32_149 = arith.constant 2 : i32
      %531 = vector.broadcast %c2_i32_149 : i32 to vector<8x128xi32>
      %532 = arith.andi %28, %531 : vector<8x128xi32>
      %c0_i32_150 = arith.constant 0 : i32
      %533 = vector.broadcast %c0_i32_150 : i32 to vector<8x128xi32>
      %534 = arith.cmpi ne, %532, %533 : vector<8x128xi32>
      %535 = arith.extui %534 : vector<8x128xi1> to vector<8x128xi32>
      %536 = arith.sitofp %535 : vector<8x128xi32> to vector<8x128xf32>
      %537 = vector.broadcast %40 : vector<1x128xf32> to vector<8x128xf32>
      %538 = arith.mulf %537, %536 : vector<8x128xf32>
      %539 = arith.addf %530, %538 : vector<8x128xf32>
      %c2_i32_151 = arith.constant 2 : i32
      %540 = vector.broadcast %c2_i32_151 : i32 to vector<8x128xi32>
      %541 = arith.andi %31, %540 : vector<8x128xi32>
      %c0_i32_152 = arith.constant 0 : i32
      %542 = vector.broadcast %c0_i32_152 : i32 to vector<8x128xi32>
      %543 = arith.cmpi ne, %541, %542 : vector<8x128xi32>
      %544 = arith.extui %543 : vector<8x128xi1> to vector<8x128xi32>
      %545 = arith.sitofp %544 : vector<8x128xi32> to vector<8x128xf32>
      %546 = vector.broadcast %41 : vector<1x128xf32> to vector<8x128xf32>
      %547 = arith.mulf %546, %545 : vector<8x128xf32>
      %548 = arith.addf %539, %547 : vector<8x128xf32>
      %c2_i32_153 = arith.constant 2 : i32
      %549 = vector.broadcast %c2_i32_153 : i32 to vector<8x128xi32>
      %550 = arith.andi %34, %549 : vector<8x128xi32>
      %c0_i32_154 = arith.constant 0 : i32
      %551 = vector.broadcast %c0_i32_154 : i32 to vector<8x128xi32>
      %552 = arith.cmpi ne, %550, %551 : vector<8x128xi32>
      %553 = arith.extui %552 : vector<8x128xi1> to vector<8x128xi32>
      %554 = arith.sitofp %553 : vector<8x128xi32> to vector<8x128xf32>
      %555 = vector.broadcast %42 : vector<1x128xf32> to vector<8x128xf32>
      %556 = arith.mulf %555, %554 : vector<8x128xf32>
      %557 = arith.addf %548, %556 : vector<8x128xf32>
      %558 = vector.broadcast %10 : vector<1x128xf32> to vector<8x128xf32>
      %559 = arith.subf %557, %558 : vector<8x128xf32>
      %c48 = arith.constant 48 : index
      %c0_155 = arith.constant 0 : index
      %560 = vector.load %arg8[%c48, %c0_155] : memref<64x128xf32, #tpu.memory_space<vmem>>, vector<8x128xf32>
      tpu.vector_store %arg8[%c48, %c0_155], %559 {strides = array<i32>} : memref<64x128xf32, #tpu.memory_space<vmem>>, vector<8x128xf32>,
      %c1_i32 = arith.constant 1 : i32
      %561 = vector.broadcast %c1_i32 : i32 to vector<8x128xi32>
      %562 = arith.andi %13, %561 : vector<8x128xi32>
      %c0_i32_156 = arith.constant 0 : i32
      %563 = vector.broadcast %c0_i32_156 : i32 to vector<8x128xi32>
      %564 = arith.cmpi ne, %562, %563 : vector<8x128xi32>
      %565 = arith.extui %564 : vector<8x128xi1> to vector<8x128xi32>
      %566 = arith.sitofp %565 : vector<8x128xi32> to vector<8x128xf32>
      %567 = vector.broadcast %35 : vector<1x128xf32> to vector<8x128xf32>
      %568 = arith.mulf %567, %566 : vector<8x128xf32>
      %c1_i32_157 = arith.constant 1 : i32
      %569 = vector.broadcast %c1_i32_157 : i32 to vector<8x128xi32>
      %570 = arith.andi %16, %569 : vector<8x128xi32>
      %c0_i32_158 = arith.constant 0 : i32
      %571 = vector.broadcast %c0_i32_158 : i32 to vector<8x128xi32>
      %572 = arith.cmpi ne, %570, %571 : vector<8x128xi32>
      %573 = arith.extui %572 : vector<8x128xi1> to vector<8x128xi32>
      %574 = arith.sitofp %573 : vector<8x128xi32> to vector<8x128xf32>
      %575 = vector.broadcast %36 : vector<1x128xf32> to vector<8x128xf32>
      %576 = arith.mulf %575, %574 : vector<8x128xf32>
      %577 = arith.addf %568, %576 : vector<8x128xf32>
      %c1_i32_159 = arith.constant 1 : i32
      %578 = vector.broadcast %c1_i32_159 : i32 to vector<8x128xi32>
      %579 = arith.andi %19, %578 : vector<8x128xi32>
      %c0_i32_160 = arith.constant 0 : i32
      %580 = vector.broadcast %c0_i32_160 : i32 to vector<8x128xi32>
      %581 = arith.cmpi ne, %579, %580 : vector<8x128xi32>
      %582 = arith.extui %581 : vector<8x128xi1> to vector<8x128xi32>
      %583 = arith.sitofp %582 : vector<8x128xi32> to vector<8x128xf32>
      %584 = vector.broadcast %37 : vector<1x128xf32> to vector<8x128xf32>
      %585 = arith.mulf %584, %583 : vector<8x128xf32>
      %586 = arith.addf %577, %585 : vector<8x128xf32>
      %c1_i32_161 = arith.constant 1 : i32
      %587 = vector.broadcast %c1_i32_161 : i32 to vector<8x128xi32>
      %588 = arith.andi %22, %587 : vector<8x128xi32>
      %c0_i32_162 = arith.constant 0 : i32
      %589 = vector.broadcast %c0_i32_162 : i32 to vector<8x128xi32>
      %590 = arith.cmpi ne, %588, %589 : vector<8x128xi32>
      %591 = arith.extui %590 : vector<8x128xi1> to vector<8x128xi32>
      %592 = arith.sitofp %591 : vector<8x128xi32> to vector<8x128xf32>
      %593 = vector.broadcast %38 : vector<1x128xf32> to vector<8x128xf32>
      %594 = arith.mulf %593, %592 : vector<8x128xf32>
      %595 = arith.addf %586, %594 : vector<8x128xf32>
      %c1_i32_163 = arith.constant 1 : i32
      %596 = vector.broadcast %c1_i32_163 : i32 to vector<8x128xi32>
      %597 = arith.andi %25, %596 : vector<8x128xi32>
      %c0_i32_164 = arith.constant 0 : i32
      %598 = vector.broadcast %c0_i32_164 : i32 to vector<8x128xi32>
      %599 = arith.cmpi ne, %597, %598 : vector<8x128xi32>
      %600 = arith.extui %599 : vector<8x128xi1> to vector<8x128xi32>
      %601 = arith.sitofp %600 : vector<8x128xi32> to vector<8x128xf32>
      %602 = vector.broadcast %39 : vector<1x128xf32> to vector<8x128xf32>
      %603 = arith.mulf %602, %601 : vector<8x128xf32>
      %604 = arith.addf %595, %603 : vector<8x128xf32>
      %c1_i32_165 = arith.constant 1 : i32
      %605 = vector.broadcast %c1_i32_165 : i32 to vector<8x128xi32>
      %606 = arith.andi %28, %605 : vector<8x128xi32>
      %c0_i32_166 = arith.constant 0 : i32
      %607 = vector.broadcast %c0_i32_166 : i32 to vector<8x128xi32>
      %608 = arith.cmpi ne, %606, %607 : vector<8x128xi32>
      %609 = arith.extui %608 : vector<8x128xi1> to vector<8x128xi32>
      %610 = arith.sitofp %609 : vector<8x128xi32> to vector<8x128xf32>
      %611 = vector.broadcast %40 : vector<1x128xf32> to vector<8x128xf32>
      %612 = arith.mulf %611, %610 : vector<8x128xf32>
      %613 = arith.addf %604, %612 : vector<8x128xf32>
      %c1_i32_167 = arith.constant 1 : i32
      %614 = vector.broadcast %c1_i32_167 : i32 to vector<8x128xi32>
      %615 = arith.andi %31, %614 : vector<8x128xi32>
      %c0_i32_168 = arith.constant 0 : i32
      %616 = vector.broadcast %c0_i32_168 : i32 to vector<8x128xi32>
      %617 = arith.cmpi ne, %615, %616 : vector<8x128xi32>
      %618 = arith.extui %617 : vector<8x128xi1> to vector<8x128xi32>
      %619 = arith.sitofp %618 : vector<8x128xi32> to vector<8x128xf32>
      %620 = vector.broadcast %41 : vector<1x128xf32> to vector<8x128xf32>
      %621 = arith.mulf %620, %619 : vector<8x128xf32>
      %622 = arith.addf %613, %621 : vector<8x128xf32>
      %c1_i32_169 = arith.constant 1 : i32
      %623 = vector.broadcast %c1_i32_169 : i32 to vector<8x128xi32>
      %624 = arith.andi %34, %623 : vector<8x128xi32>
      %c0_i32_170 = arith.constant 0 : i32
      %625 = vector.broadcast %c0_i32_170 : i32 to vector<8x128xi32>
      %626 = arith.cmpi ne, %624, %625 : vector<8x128xi32>
      %627 = arith.extui %626 : vector<8x128xi1> to vector<8x128xi32>
      %628 = arith.sitofp %627 : vector<8x128xi32> to vector<8x128xf32>
      %629 = vector.broadcast %42 : vector<1x128xf32> to vector<8x128xf32>
      %630 = arith.mulf %629, %628 : vector<8x128xf32>
      %631 = arith.addf %622, %630 : vector<8x128xf32>
      %632 = vector.broadcast %10 : vector<1x128xf32> to vector<8x128xf32>
      %633 = arith.subf %631, %632 : vector<8x128xf32>
      %c56 = arith.constant 56 : index
      %c0_171 = arith.constant 0 : index
      %634 = vector.load %arg8[%c56, %c0_171] : memref<64x128xf32, #tpu.memory_space<vmem>>, vector<8x128xf32>
      tpu.vector_store %arg8[%c56, %c0_171], %633 {strides = array<i32>} : memref<64x128xf32, #tpu.memory_space<vmem>>, vector<8x128xf32>,
    } else {
    }
    %c0 = arith.constant 0 : index
    %c0_1 = arith.constant 0 : index
    %3 = vector.load %arg2[%c0, %c0_1] : memref<16x64xf32, #tpu.memory_space<vmem>>, vector<16x64xf32>
    %c0_2 = arith.constant 0 : index
    %c0_3 = arith.constant 0 : index
    %4 = vector.load %arg8[%c0_2, %c0_3] : memref<64x128xf32, #tpu.memory_space<vmem>>, vector<64x128xf32>
    %cst = arith.constant dense<0.000000e+00> : vector<16x128xf32>
    %5 = tpu.matmul %3, %4, %cst {dimension_numbers = #tpu.dot_dimension_numbers<[1], [0], [0], [1], [0, 0, 1, 1], [], []>} : vector<16x64xf32>, vector<64x128xf32>, vector<16x128xf32> -> vector<16x128xf32>
    %c0_4 = arith.constant 0 : index
    %c0_5 = arith.constant 0 : index
    %6 = vector.load %arg6[%c0_4, %c0_5] : memref<1x128xf32, #tpu.memory_space<vmem>>, vector<1x128xf32>
    %7 = vector.broadcast %6 : vector<1x128xf32> to vector<16x128xf32>
    %8 = arith.addf %5, %7 : vector<16x128xf32>
    %c0_6 = arith.constant 0 : index
    %c0_7 = arith.constant 0 : index
    %9 = vector.load %arg7[%c0_6, %c0_7] : memref<16x128xf32, #tpu.memory_space<vmem>>, vector<16x128xf32>
    tpu.vector_store %arg7[%c0_6, %c0_7], %8 {strides = array<i32>} : memref<16x128xf32, #tpu.memory_space<vmem>>, vector<16x128xf32>,
    return
  }
  func.func @transform_0(%arg0: i32, %arg1: i32) -> (i32, i32) {
    %c0_i32 = arith.constant 0 : i32
    %c0_i32_0 = arith.constant 0 : i32
    return %arg1, %c0_i32 : i32, i32
  }
  func.func @transform_1(%arg0: i32, %arg1: i32) -> (i32, i32, i32) {
    %c0_i32 = arith.constant 0 : i32
    %c0_i32_0 = arith.constant 0 : i32
    %c0_i32_1 = arith.constant 0 : i32
    return %c0_i32, %c0_i32_0, %arg0 : i32, i32, i32
  }
  func.func @transform_2(%arg0: i32, %arg1: i32) -> (i32, i32) {
    %c0_i32 = arith.constant 0 : i32
    %c0_i32_0 = arith.constant 0 : i32
    return %c0_i32, %arg0 : i32, i32
  }
  func.func @transform_3(%arg0: i32, %arg1: i32) -> (i32, i32) {
    %c0_i32 = arith.constant 0 : i32
    %c0_i32_0 = arith.constant 0 : i32
    return %c0_i32, %arg0 : i32, i32
  }
  func.func @transform_4(%arg0: i32, %arg1: i32) -> (i32, i32) {
    %c0_i32 = arith.constant 0 : i32
    %c0_i32_0 = arith.constant 0 : i32
    return %c0_i32, %arg0 : i32, i32
  }
  func.func @transform_5(%arg0: i32, %arg1: i32) -> (i32, i32) {
    %c0_i32 = arith.constant 0 : i32
    return %arg1, %arg0 : i32, i32
  }
}

</mosaic_0001>

<llo_original>
// kernel: tpu_custom_call.1
$region0: #{tpu_custom_call.1}
  #allocation0 [shape = 'u32[]', space=smem, size = 0x4, offset = 0x4, fixed_abs, tag = 'smem constant byte address 0x4 - core index']
  #allocation1 [shape = 'u32[144,128]{1,0:T(1,128)}', space=vmem, size = 0x12000, scoped, tag = 'internal scratch']
  #allocation2 [shape = 'f32[64,128]{1,0:T(8,128)}', space=vmem, size = 0x8000, scoped, tag = 'scratch operand']
  %s0 = inlined_call_operand.hbm [shape: f32[16,64], index: 0, kind: input, shape index: {}]
  %s1 = inlined_call_operand.hbm [shape: s8[8,8,128], index: 1, kind: input, shape index: {}]
  %s2 = inlined_call_operand.hbm [shape: f32[8,128], index: 2, kind: input, shape index: {}]
  %s3 = inlined_call_operand.vmem [shape: f32[1,128], index: 3, kind: input, shape index: {}]
  %s4 = inlined_call_operand.vmem [shape: f32[1,128], index: 4, kind: input, shape index: {}]
  %s5 = inlined_call_operand.hbm [shape: f32[16,128], index: 5, kind: output, shape index: {}]
  %s6 = sld [smem:[#allocation0]]
  $region46: #{tpu_custom_call.1} parent=0
    _
  %s8 = ssub.s32 1, %s6
  %s9 = scalar_select 0, %s8, %s6
  $region1: #{tpu_custom_call.1} parent=0
    #allocation3 [shape = 'u8[8192]{0}', space=vmem, size = 0x2000, scoped, tag = 'input window, operand 0, single buffered']
    #allocation4 [shape = 's32[1]{0}', space=sflag, size = 0x4, scoped, tag = 'scoped memory for tpu_custom_call.1']
    #allocation5 [shape = 's32[1]{0}', space=sflag, size = 0x4, scoped, tag = 'scoped memory for tpu_custom_call.1']
    #allocation6 [shape = 'u8[8192]{0}', space=vmem, size = 0x2000, scoped, tag = 'input window, operand 1, single buffered']
    #allocation7 [shape = 's32[1]{0}', space=sflag, size = 0x4, scoped, tag = 'scoped memory for tpu_custom_call.1']
    #allocation8 [shape = 'u8[4096]{0}', space=vmem, size = 0x1000, scoped, tag = 'input window, operand 2, single buffered']
    #allocation9 [shape = 'u8[8192]{0}', space=vmem, size = 0x2000, scoped, tag = 'output window, operand 0, single buffered']
    %10 = vsyncpa [#allocation4], 0
    %11 = vsyncpa [#allocation7], 0
    %12 = vsyncpa [#allocation5], 0
    // Predicated region
    $region2: #{tpu_custom_call.1} parent=1 // pred_check
      _
    $region3: #{tpu_custom_call.1} parent=1 // pred_check_branch
      %14 = sbr.rel (0) target = $region5
    $region4: #{tpu_custom_call.1} parent=1 // pred_region
      %s16 = ssub.s32 256, 256
      %17 = vsyncadd [#allocation4], %s16
      %s18 = sshll.u32 [#allocation3], 4
      %s19 = int_to_ptr.vmem [resolvable:$true] %s18
      %24 = dma.hbm_to_vmem [thread:$0]  %s0, 256, %s19, [#allocation4], 128, 128, 8
    $region5: #{tpu_custom_call.1} parent=1 // pred_fallthru
      _
    // Predicated region
    $region6: #{tpu_custom_call.1} parent=1 // pred_check
      _
    $region7: #{tpu_custom_call.1} parent=1 // pred_check_branch
      %26 = sbr.rel (0) target = $region9
    $region8: #{tpu_custom_call.1} parent=1 // pred_region
      %s28 = ssub.s32 256, 256
      %29 = vsyncadd [#allocation7], %s28
      %s30 = sshll.u32 [#allocation6], 4
      %s31 = int_to_ptr.vmem [resolvable:$true] %s30
      %36 = dma.hbm_to_vmem [thread:$0]  %s1, 256, %s31, [#allocation7], 32, 32, 2
    $region9: #{tpu_custom_call.1} parent=1 // pred_fallthru
      _
    // Predicated region
    $region10: #{tpu_custom_call.1} parent=1 // pred_check
      _
    $region11: #{tpu_custom_call.1} parent=1 // pred_check_branch
      %38 = sbr.rel (0) target = $region13
    $region12: #{tpu_custom_call.1} parent=1 // pred_region
      %s40 = ssub.s32 128, 128
      %41 = vsyncadd [#allocation7], %s40
      %s43 = sshll.u32 [#allocation8], 4
      %s44 = int_to_ptr.vmem [resolvable:$true] %s43
      %46 = dma.hbm_to_vmem [thread:$0]  %s2, 128, %s44, [#allocation7]
    $region13: #{tpu_custom_call.1} parent=1 // pred_fallthru
      _
    // Predicated region
    $region14: #{tpu_custom_call.1} parent=1 // pred_check
      _
    $region15: #{tpu_custom_call.1} parent=1 // pred_check_branch
      %48 = sbr.rel (0) target = $region17
    $region16: #{tpu_custom_call.1} parent=1 // pred_region
      _
    $region17: #{tpu_custom_call.1} parent=1 // pred_fallthru
      _
    // Predicated region
    $region18: #{tpu_custom_call.1} parent=1 // pred_check
      _
    $region19: #{tpu_custom_call.1} parent=1 // pred_check_branch
      %50 = sbr.rel (0) target = $region21
    $region20: #{tpu_custom_call.1} parent=1 // pred_region
      _
    $region21: #{tpu_custom_call.1} parent=1 // pred_fallthru
      _
    // Predicated region
    $region22: #{tpu_custom_call.1} parent=1 // pred_check
      _
    $region23: #{tpu_custom_call.1} parent=1 // pred_check_branch
      %52 = sbr.rel (0) target = $region25
    $region24: #{tpu_custom_call.1} parent=1 // pred_region
      %53 = dma.done [#allocation4], 256
    $region25: #{tpu_custom_call.1} parent=1 // pred_fallthru
      _
    // Predicated region
    $region26: #{tpu_custom_call.1} parent=1 // pred_check
      _
    $region27: #{tpu_custom_call.1} parent=1 // pred_check_branch
      %55 = sbr.rel (0) target = $region29
    $region28: #{tpu_custom_call.1} parent=1 // pred_region
      %56 = dma.done [#allocation7], 256
    $region29: #{tpu_custom_call.1} parent=1 // pred_fallthru
      _
    // Predicated region
    $region30: #{tpu_custom_call.1} parent=1 // pred_check
      _
    $region31: #{tpu_custom_call.1} parent=1 // pred_check_branch
      %58 = sbr.rel (0) target = $region33
    $region32: #{tpu_custom_call.1} parent=1 // pred_region
      %59 = dma.done [#allocation7], 128
    $region33: #{tpu_custom_call.1} parent=1 // pred_fallthru
      _
    %p60 = scmp.eq.s32.totalorder 0, 0
    // Predicated region
    $region34: #{tpu_custom_call.1} parent=1 // pred_check
      %p61 = pneg %p60
    $region35: #{tpu_custom_call.1} parent=1 // pred_check_branch
      %63 = sbr.rel (%p61) target = $region37
    $region36: #{tpu_custom_call.1} parent=1 // pred_region
      %v64 = vld [vmem:[%s3] sm:$0x1]
      %v65 = vld [vmem:[#allocation6] sm:$0x3]
      %v66 = vunpack.c.0.s8 %v65
      %s67 = scalar_lea.vmem [#allocation6], 2
      %v68 = vld [vmem:[%s67] sm:$0x3]
      %v69 = vunpack.c.0.s8 %v68
      %s70 = scalar_lea.vmem [#allocation6], 4
      %v71 = vld [vmem:[%s70] sm:$0x3]
      %v72 = vunpack.c.0.s8 %v71
      %s73 = scalar_lea.vmem [#allocation6], 6
      %v74 = vld [vmem:[%s73] sm:$0x3]
      %v75 = vunpack.c.0.s8 %v74
      %s76 = scalar_lea.vmem [#allocation6], 8
      %v77 = vld [vmem:[%s76] sm:$0x3]
      %v78 = vunpack.c.0.s8 %v77
      %s79 = scalar_lea.vmem [#allocation6], 10
      %v80 = vld [vmem:[%s79] sm:$0x3]
      %v81 = vunpack.c.0.s8 %v80
      %s82 = scalar_lea.vmem [#allocation6], 12
      %v83 = vld [vmem:[%s82] sm:$0x3]
      %v84 = vunpack.c.0.s8 %v83
      %s85 = scalar_lea.vmem [#allocation6], 14
      %v86 = vld [vmem:[%s85] sm:$0x3]
      %v87 = vunpack.c.0.s8 %v86
      %v88 = vld [vmem:[#allocation8] sm:$0x1]
      %v89 = vld [vmem:[#allocation8 + $0x1] sm:$0x1]
      %v90 = vld [vmem:[#allocation8 + $0x2] sm:$0x1]
      %v91 = vld [vmem:[#allocation8 + $0x3] sm:$0x1]
      %v92 = vld [vmem:[#allocation8 + $0x4] sm:$0x1]
      %v93 = vld [vmem:[#allocation8 + $0x5] sm:$0x1]
      %v94 = vld [vmem:[#allocation8 + $0x6] sm:$0x1]
      %v95 = vld [vmem:[#allocation8 + $0x7] sm:$0x1]
      %v96 = vand.u32 %v66, 128
      %vm97 = vcmp.ne.s32.totalorder %v96, 0
      %v98 = vsel %vm97, 1, 0
      %v99 = vcvt.s32.f32 %v98
      %v100 = vlaneseq
      %v101 = vshrl.u32 %v100, 7
      %v102 = vsub.s32 0, %v101
      %v103 = vrot.slane %v88, %v102
      %v104 = vmul.f32 %v103, %v99
      %v105 = vand.u32 %v69, 128
      %vm106 = vcmp.ne.s32.totalorder %v105, 0
      %v107 = vsel %vm106, 1, 0
      %v108 = vcvt.s32.f32 %v107
      %v109 = vlaneseq
      %v110 = vshrl.u32 %v109, 7
      %v111 = vsub.s32 0, %v110
      %v112 = vrot.slane %v89, %v111
      %v113 = vmul.f32 %v112, %v108
      %v114 = vadd.f32 %v104, %v113
      %v115 = vand.u32 %v72, 128
      %vm116 = vcmp.ne.s32.totalorder %v115, 0
      %v117 = vsel %vm116, 1, 0
      %v118 = vcvt.s32.f32 %v117
      %v119 = vlaneseq
      %v120 = vshrl.u32 %v119, 7
      %v121 = vsub.s32 0, %v120
      %v122 = vrot.slane %v90, %v121
      %v123 = vmul.f32 %v122, %v118
      %v124 = vadd.f32 %v114, %v123
      %v125 = vand.u32 %v75, 128
      %vm126 = vcmp.ne.s32.totalorder %v125, 0
      %v127 = vsel %vm126, 1, 0
      %v128 = vcvt.s32.f32 %v127
      %v129 = vlaneseq
      %v130 = vshrl.u32 %v129, 7
      %v131 = vsub.s32 0, %v130
      %v132 = vrot.slane %v91, %v131
      %v133 = vmul.f32 %v132, %v128
      %v134 = vadd.f32 %v124, %v133
      %v135 = vand.u32 %v78, 128
      %vm136 = vcmp.ne.s32.totalorder %v135, 0
      %v137 = vsel %vm136, 1, 0
      %v138 = vcvt.s32.f32 %v137
      %v139 = vlaneseq
      %v140 = vshrl.u32 %v139, 7
      %v141 = vsub.s32 0, %v140
      %v142 = vrot.slane %v92, %v141
      %v143 = vmul.f32 %v142, %v138
      %v144 = vadd.f32 %v134, %v143
      %v145 = vand.u32 %v81, 128
      %vm146 = vcmp.ne.s32.totalorder %v145, 0
      %v147 = vsel %vm146, 1, 0
      %v148 = vcvt.s32.f32 %v147
      %v149 = vlaneseq
      %v150 = vshrl.u32 %v149, 7
      %v151 = vsub.s32 0, %v150
      %v152 = vrot.slane %v93, %v151
      %v153 = vmul.f32 %v152, %v148
      %v154 = vadd.f32 %v144, %v153
      %v155 = vand.u32 %v84, 128
      %vm156 = vcmp.ne.s32.totalorder %v155, 0
      %v157 = vsel %vm156, 1, 0
      %v158 = vcvt.s32.f32 %v157
      %v159 = vlaneseq
      %v160 = vshrl.u32 %v159, 7
      %v161 = vsub.s32 0, %v160
      %v162 = vrot.slane %v94, %v161
      %v163 = vmul.f32 %v162, %v158
      %v164 = vadd.f32 %v154, %v163
      %v165 = vand.u32 %v87, 128
      %vm166 = vcmp.ne.s32.totalorder %v165, 0
      %v167 = vsel %vm166, 1, 0
      %v168 = vcvt.s32.f32 %v167
      %v169 = vlaneseq
      %v170 = vshrl.u32 %v169, 7
      %v171 = vsub.s32 0, %v170
      %v172 = vrot.slane %v95, %v171
      %v173 = vmul.f32 %v172, %v168
      %v174 = vadd.f32 %v164, %v173
      %v176 = vlaneseq
      %v177 = vshrl.u32 %v176, 7
      %v178 = vsub.s32 0, %v177
      %v179 = vrot.slane %v64, %v178
      %v181 = vsub.f32 %v174, %v179
      %182 = vst [vmem:[#allocation2] sm:$0xff] %v181
      %v183 = vand.u32 %v66, 64
      %vm184 = vcmp.ne.s32.totalorder %v183, 0
      %v185 = vsel %vm184, 1, 0
      %v186 = vcvt.s32.f32 %v185
      %v187 = vmul.f32 %v103, %v186
      %v188 = vand.u32 %v69, 64
      %vm189 = vcmp.ne.s32.totalorder %v188, 0
      %v190 = vsel %vm189, 1, 0
      %v191 = vcvt.s32.f32 %v190
      %v192 = vmul.f32 %v112, %v191
      %v193 = vadd.f32 %v187, %v192
      %v194 = vand.u32 %v72, 64
      %vm195 = vcmp.ne.s32.totalorder %v194, 0
      %v196 = vsel %vm195, 1, 0
      %v197 = vcvt.s32.f32 %v196
      %v198 = vmul.f32 %v122, %v197
      %v199 = vadd.f32 %v193, %v198
      %v200 = vand.u32 %v75, 64
      %vm201 = vcmp.ne.s32.totalorder %v200, 0
      %v202 = vsel %vm201, 1, 0
      %v203 = vcvt.s32.f32 %v202
      %v204 = vmul.f32 %v132, %v203
      %v205 = vadd.f32 %v199, %v204
      %v206 = vand.u32 %v78, 64
      %vm207 = vcmp.ne.s32.totalorder %v206, 0
      %v208 = vsel %vm207, 1, 0
      %v209 = vcvt.s32.f32 %v208
      %v210 = vmul.f32 %v142, %v209
      %v211 = vadd.f32 %v205, %v210
      %v212 = vand.u32 %v81, 64
      %vm213 = vcmp.ne.s32.totalorder %v212, 0
      %v214 = vsel %vm213, 1, 0
      %v215 = vcvt.s32.f32 %v214
      %v216 = vmul.f32 %v152, %v215
      %v217 = vadd.f32 %v211, %v216
      %v218 = vand.u32 %v84, 64
      %vm219 = vcmp.ne.s32.totalorder %v218, 0
      %v220 = vsel %vm219, 1, 0
      %v221 = vcvt.s32.f32 %v220
      %v222 = vmul.f32 %v162, %v221
      %v223 = vadd.f32 %v217, %v222
      %v224 = vand.u32 %v87, 64
      %vm225 = vcmp.ne.s32.totalorder %v224, 0
      %v226 = vsel %vm225, 1, 0
      %v227 = vcvt.s32.f32 %v226
      %v228 = vmul.f32 %v172, %v227
      %v229 = vadd.f32 %v223, %v228
      %v230 = vsub.f32 %v229, %v179
      %231 = vst [vmem:[#allocation2 + $0x8] sm:$0xff] %v230
      %v232 = vand.u32 %v66, 32
      %vm233 = vcmp.ne.s32.totalorder %v232, 0
      %v234 = vsel %vm233, 1, 0
      %v235 = vcvt.s32.f32 %v234
      %v236 = vmul.f32 %v103, %v235
      %v237 = vand.u32 %v69, 32
      %vm238 = vcmp.ne.s32.totalorder %v237, 0
      %v239 = vsel %vm238, 1, 0
      %v240 = vcvt.s32.f32 %v239
      %v241 = vmul.f32 %v112, %v240
      %v242 = vadd.f32 %v236, %v241
      %v243 = vand.u32 %v72, 32
      %vm244 = vcmp.ne.s32.totalorder %v243, 0
      %v245 = vsel %vm244, 1, 0
      %v246 = vcvt.s32.f32 %v245
      %v247 = vmul.f32 %v122, %v246
      %v248 = vadd.f32 %v242, %v247
      %v249 = vand.u32 %v75, 32
      %vm250 = vcmp.ne.s32.totalorder %v249, 0
      %v251 = vsel %vm250, 1, 0
      %v252 = vcvt.s32.f32 %v251
      %v253 = vmul.f32 %v132, %v252
      %v254 = vadd.f32 %v248, %v253
      %v255 = vand.u32 %v78, 32
      %vm256 = vcmp.ne.s32.totalorder %v255, 0
      %v257 = vsel %vm256, 1, 0
      %v258 = vcvt.s32.f32 %v257
      %v259 = vmul.f32 %v142, %v258
      %v260 = vadd.f32 %v254, %v259
      %v261 = vand.u32 %v81, 32
      %vm262 = vcmp.ne.s32.totalorder %v261, 0
      %v263 = vsel %vm262, 1, 0
      %v264 = vcvt.s32.f32 %v263
      %v265 = vmul.f32 %v152, %v264
      %v266 = vadd.f32 %v260, %v265
      %v267 = vand.u32 %v84, 32
      %vm268 = vcmp.ne.s32.totalorder %v267, 0
      %v269 = vsel %vm268, 1, 0
      %v270 = vcvt.s32.f32 %v269
      %v271 = vmul.f32 %v162, %v270
      %v272 = vadd.f32 %v266, %v271
      %v273 = vand.u32 %v87, 32
      %vm274 = vcmp.ne.s32.totalorder %v273, 0
      %v275 = vsel %vm274, 1, 0
      %v276 = vcvt.s32.f32 %v275
      %v277 = vmul.f32 %v172, %v276
      %v278 = vadd.f32 %v272, %v277
      %v279 = vsub.f32 %v278, %v179
      %280 = vst [vmem:[#allocation2 + $0x10] sm:$0xff] %v279
      %v281 = vand.u32 %v66, 16
      %vm282 = vcmp.ne.s32.totalorder %v281, 0
      %v283 = vsel %vm282, 1, 0
      %v284 = vcvt.s32.f32 %v283
      %v285 = vmul.f32 %v103, %v284
      %v286 = vand.u32 %v69, 16
      %vm287 = vcmp.ne.s32.totalorder %v286, 0
      %v288 = vsel %vm287, 1, 0
      %v289 = vcvt.s32.f32 %v288
      %v290 = vmul.f32 %v112, %v289
      %v291 = vadd.f32 %v285, %v290
      %v292 = vand.u32 %v72, 16
      %vm293 = vcmp.ne.s32.totalorder %v292, 0
      %v294 = vsel %vm293, 1, 0
      %v295 = vcvt.s32.f32 %v294
      %v296 = vmul.f32 %v122, %v295
      %v297 = vadd.f32 %v291, %v296
      %v298 = vand.u32 %v75, 16
      %vm299 = vcmp.ne.s32.totalorder %v298, 0
      %v300 = vsel %vm299, 1, 0
      %v301 = vcvt.s32.f32 %v300
      %v302 = vmul.f32 %v132, %v301
      %v303 = vadd.f32 %v297, %v302
      %v304 = vand.u32 %v78, 16
      %vm305 = vcmp.ne.s32.totalorder %v304, 0
      %v306 = vsel %vm305, 1, 0
      %v307 = vcvt.s32.f32 %v306
      %v308 = vmul.f32 %v142, %v307
      %v309 = vadd.f32 %v303, %v308
      %v310 = vand.u32 %v81, 16
      %vm311 = vcmp.ne.s32.totalorder %v310, 0
      %v312 = vsel %vm311, 1, 0
      %v313 = vcvt.s32.f32 %v312
      %v314 = vmul.f32 %v152, %v313
      %v315 = vadd.f32 %v309, %v314
      %v316 = vand.u32 %v84, 16
      %vm317 = vcmp.ne.s32.totalorder %v316, 0
      %v318 = vsel %vm317, 1, 0
      %v319 = vcvt.s32.f32 %v318
      %v320 = vmul.f32 %v162, %v319
      %v321 = vadd.f32 %v315, %v320
      %v322 = vand.u32 %v87, 16
      %vm323 = vcmp.ne.s32.totalorder %v322, 0
      %v324 = vsel %vm323, 1, 0
      %v325 = vcvt.s32.f32 %v324
      %v326 = vmul.f32 %v172, %v325
      %v327 = vadd.f32 %v321, %v326
      %v328 = vsub.f32 %v327, %v179
      %329 = vst [vmem:[#allocation2 + $0x18] sm:$0xff] %v328
      %v330 = vand.u32 %v66, 8
      %vm331 = vcmp.ne.s32.totalorder %v330, 0
      %v332 = vsel %vm331, 1, 0
      %v333 = vcvt.s32.f32 %v332
      %v334 = vmul.f32 %v103, %v333
      %v335 = vand.u32 %v69, 8
      %vm336 = vcmp.ne.s32.totalorder %v335, 0
      %v337 = vsel %vm336, 1, 0
      %v338 = vcvt.s32.f32 %v337
      %v339 = vmul.f32 %v112, %v338
      %v340 = vadd.f32 %v334, %v339
      %v341 = vand.u32 %v72, 8
      %vm342 = vcmp.ne.s32.totalorder %v341, 0
      %v343 = vsel %vm342, 1, 0
      %v344 = vcvt.s32.f32 %v343
      %v345 = vmul.f32 %v122, %v344
      %v346 = vadd.f32 %v340, %v345
      %v347 = vand.u32 %v75, 8
      %vm348 = vcmp.ne.s32.totalorder %v347, 0
      %v349 = vsel %vm348, 1, 0
      %v350 = vcvt.s32.f32 %v349
      %v351 = vmul.f32 %v132, %v350
      %v352 = vadd.f32 %v346, %v351
      %v353 = vand.u32 %v78, 8
      %vm354 = vcmp.ne.s32.totalorder %v353, 0
      %v355 = vsel %vm354, 1, 0
      %v356 = vcvt.s32.f32 %v355
      %v357 = vmul.f32 %v142, %v356
      %v358 = vadd.f32 %v352, %v357
      %v359 = vand.u32 %v81, 8
      %vm360 = vcmp.ne.s32.totalorder %v359, 0
      %v361 = vsel %vm360, 1, 0
      %v362 = vcvt.s32.f32 %v361
      %v363 = vmul.f32 %v152, %v362
      %v364 = vadd.f32 %v358, %v363
      %v365 = vand.u32 %v84, 8
      %vm366 = vcmp.ne.s32.totalorder %v365, 0
      %v367 = vsel %vm366, 1, 0
      %v368 = vcvt.s32.f32 %v367
      %v369 = vmul.f32 %v162, %v368
      %v370 = vadd.f32 %v364, %v369
      %v371 = vand.u32 %v87, 8
      %vm372 = vcmp.ne.s32.totalorder %v371, 0
      %v373 = vsel %vm372, 1, 0
      %v374 = vcvt.s32.f32 %v373
      %v375 = vmul.f32 %v172, %v374
      %v376 = vadd.f32 %v370, %v375
      %v377 = vsub.f32 %v376, %v179
      %378 = vst [vmem:[#allocation2 + $0x20] sm:$0xff] %v377
      %v379 = vand.u32 %v66, 4
      %vm380 = vcmp.ne.s32.totalorder %v379, 0
      %v381 = vsel %vm380, 1, 0
      %v382 = vcvt.s32.f32 %v381
      %v383 = vmul.f32 %v103, %v382
      %v384 = vand.u32 %v69, 4
      %vm385 = vcmp.ne.s32.totalorder %v384, 0
      %v386 = vsel %vm385, 1, 0
      %v387 = vcvt.s32.f32 %v386
      %v388 = vmul.f32 %v112, %v387
      %v389 = vadd.f32 %v383, %v388
      %v390 = vand.u32 %v72, 4
      %vm391 = vcmp.ne.s32.totalorder %v390, 0
      %v392 = vsel %vm391, 1, 0
      %v393 = vcvt.s32.f32 %v392
      %v394 = vmul.f32 %v122, %v393
      %v395 = vadd.f32 %v389, %v394
      %v396 = vand.u32 %v75, 4
      %vm397 = vcmp.ne.s32.totalorder %v396, 0
      %v398 = vsel %vm397, 1, 0
      %v399 = vcvt.s32.f32 %v398
      %v400 = vmul.f32 %v132, %v399
      %v401 = vadd.f32 %v395, %v400
      %v402 = vand.u32 %v78, 4
      %vm403 = vcmp.ne.s32.totalorder %v402, 0
      %v404 = vsel %vm403, 1, 0
      %v405 = vcvt.s32.f32 %v404
      %v406 = vmul.f32 %v142, %v405
      %v407 = vadd.f32 %v401, %v406
      %v408 = vand.u32 %v81, 4
      %vm409 = vcmp.ne.s32.totalorder %v408, 0
      %v410 = vsel %vm409, 1, 0
      %v411 = vcvt.s32.f32 %v410
      %v412 = vmul.f32 %v152, %v411
      %v413 = vadd.f32 %v407, %v412
      %v414 = vand.u32 %v84, 4
      %vm415 = vcmp.ne.s32.totalorder %v414, 0
      %v416 = vsel %vm415, 1, 0
      %v417 = vcvt.s32.f32 %v416
      %v418 = vmul.f32 %v162, %v417
      %v419 = vadd.f32 %v413, %v418
      %v420 = vand.u32 %v87, 4
      %vm421 = vcmp.ne.s32.totalorder %v420, 0
      %v422 = vsel %vm421, 1, 0
      %v423 = vcvt.s32.f32 %v422
      %v424 = vmul.f32 %v172, %v423
      %v425 = vadd.f32 %v419, %v424
      %v426 = vsub.f32 %v425, %v179
      %427 = vst [vmem:[#allocation2 + $0x28] sm:$0xff] %v426
      %v428 = vand.u32 %v66, 2
      %vm429 = vcmp.ne.s32.totalorder %v428, 0
      %v430 = vsel %vm429, 1, 0
      %v431 = vcvt.s32.f32 %v430
      %v432 = vmul.f32 %v103, %v431
      %v433 = vand.u32 %v69, 2
      %vm434 = vcmp.ne.s32.totalorder %v433, 0
      %v435 = vsel %vm434, 1, 0
      %v436 = vcvt.s32.f32 %v435
      %v437 = vmul.f32 %v112, %v436
      %v438 = vadd.f32 %v432, %v437
      %v439 = vand.u32 %v72, 2
      %vm440 = vcmp.ne.s32.totalorder %v439, 0
      %v441 = vsel %vm440, 1, 0
      %v442 = vcvt.s32.f32 %v441
      %v443 = vmul.f32 %v122, %v442
      %v444 = vadd.f32 %v438, %v443
      %v445 = vand.u32 %v75, 2
      %vm446 = vcmp.ne.s32.totalorder %v445, 0
      %v447 = vsel %vm446, 1, 0
      %v448 = vcvt.s32.f32 %v447
      %v449 = vmul.f32 %v132, %v448
      %v450 = vadd.f32 %v444, %v449
      %v451 = vand.u32 %v78, 2
      %vm452 = vcmp.ne.s32.totalorder %v451, 0
      %v453 = vsel %vm452, 1, 0
      %v454 = vcvt.s32.f32 %v453
      %v455 = vmul.f32 %v142, %v454
      %v456 = vadd.f32 %v450, %v455
      %v457 = vand.u32 %v81, 2
      %vm458 = vcmp.ne.s32.totalorder %v457, 0
      %v459 = vsel %vm458, 1, 0
      %v460 = vcvt.s32.f32 %v459
      %v461 = vmul.f32 %v152, %v460
      %v462 = vadd.f32 %v456, %v461
      %v463 = vand.u32 %v84, 2
      %vm464 = vcmp.ne.s32.totalorder %v463, 0
      %v465 = vsel %vm464, 1, 0
      %v466 = vcvt.s32.f32 %v465
      %v467 = vmul.f32 %v162, %v466
      %v468 = vadd.f32 %v462, %v467
      %v469 = vand.u32 %v87, 2
      %vm470 = vcmp.ne.s32.totalorder %v469, 0
      %v471 = vsel %vm470, 1, 0
      %v472 = vcvt.s32.f32 %v471
      %v473 = vmul.f32 %v172, %v472
      %v474 = vadd.f32 %v468, %v473
      %v475 = vsub.f32 %v474, %v179
      %476 = vst [vmem:[#allocation2 + $0x30] sm:$0xff] %v475
      %v477 = vand.u32 %v66, 1
      %vm478 = vcmp.ne.s32.totalorder %v477, 0
      %v479 = vsel %vm478, 1, 0
      %v480 = vcvt.s32.f32 %v479
      %v481 = vmul.f32 %v103, %v480
      %v482 = vand.u32 %v69, 1
      %vm483 = vcmp.ne.s32.totalorder %v482, 0
      %v484 = vsel %vm483, 1, 0
      %v485 = vcvt.s32.f32 %v484
      %v486 = vmul.f32 %v112, %v485
      %v487 = vadd.f32 %v481, %v486
      %v488 = vand.u32 %v72, 1
      %vm489 = vcmp.ne.s32.totalorder %v488, 0
      %v490 = vsel %vm489, 1, 0
      %v491 = vcvt.s32.f32 %v490
      %v492 = vmul.f32 %v122, %v491
      %v493 = vadd.f32 %v487, %v492
      %v494 = vand.u32 %v75, 1
      %vm495 = vcmp.ne.s32.totalorder %v494, 0
      %v496 = vsel %vm495, 1, 0
      %v497 = vcvt.s32.f32 %v496
      %v498 = vmul.f32 %v132, %v497
      %v499 = vadd.f32 %v493, %v498
      %v500 = vand.u32 %v78, 1
      %vm501 = vcmp.ne.s32.totalorder %v500, 0
      %v502 = vsel %vm501, 1, 0
      %v503 = vcvt.s32.f32 %v502
      %v504 = vmul.f32 %v142, %v503
      %v505 = vadd.f32 %v499, %v504
      %v506 = vand.u32 %v81, 1
      %vm507 = vcmp.ne.s32.totalorder %v506, 0
      %v508 = vsel %vm507, 1, 0
      %v509 = vcvt.s32.f32 %v508
      %v510 = vmul.f32 %v152, %v509
      %v511 = vadd.f32 %v505, %v510
      %v512 = vand.u32 %v84, 1
      %vm513 = vcmp.ne.s32.totalorder %v512, 0
      %v514 = vsel %vm513, 1, 0
      %v515 = vcvt.s32.f32 %v514
      %v516 = vmul.f32 %v162, %v515
      %v517 = vadd.f32 %v511, %v516
      %v518 = vand.u32 %v87, 1
      %vm519 = vcmp.ne.s32.totalorder %v518, 0
      %v520 = vsel %vm519, 1, 0
      %v521 = vcvt.s32.f32 %v520
      %v522 = vmul.f32 %v172, %v521
      %v523 = vadd.f32 %v517, %v522
      %v524 = vsub.f32 %v523, %v179
      %525 = vst [vmem:[#allocation2 + $0x38] sm:$0xff] %v524
    $region37: #{tpu_custom_call.1} parent=1 // pred_fallthru
      _
    %v526 = vld [vmem:[#allocation3] sm:$0xff]
    %v527 = vld [vmem:[#allocation3 + $0x8] sm:$0xff]
    %v528 = vld [vmem:[#allocation2] sm:$0xff]
    %v529 = vld [vmem:[#allocation2 + $0x8] sm:$0xff]
    %v530 = vld [vmem:[#allocation2 + $0x10] sm:$0xff]
    %v531 = vld [vmem:[#allocation2 + $0x18] sm:$0xff]
    %v532 = vld [vmem:[#allocation2 + $0x20] sm:$0xff]
    %v533 = vld [vmem:[#allocation2 + $0x28] sm:$0xff]
    %v534 = vld [vmem:[#allocation2 + $0x30] sm:$0xff]
    %v535 = vld [vmem:[#allocation2 + $0x38] sm:$0xff]
    %v536 = vld [vmem:[%s4] sm:$0x1]
    %v538 = vlaneseq
    %v539 = vshrl.u32 %v538, 7
    %v540 = vsub.s32 0, %v539
    %v541 = vrot.slane %v536, %v540
    %vm543 = vcmask 523264
    %v545 = vsel %vm543, %v526, 0
    %v548 = vsel %vm543, %v527, 0
    %550 = vmatprep.subr.mxu0 0.0
    %551 = vmatpush1.msra.mxu0 %v528
    %552 = vmatprep.subr.mxu0 0.0
    %553 = vmatpush1.msra.mxu0 %v529
    %554 = vmatprep.subr.mxu0 0.0
    %555 = vmatpush1.msra.mxu0 %v530
    %556 = vmatprep.subr.mxu0 0.0
    %557 = vmatpush1.msra.mxu0 %v531
    %558 = vmatprep.subr.mxu0 0.0
    %559 = vmatpush1.msra.mxu0 %v532
    %560 = vmatprep.subr.mxu0 0.0
    %561 = vmatpush1.msra.mxu0 %v533
    %562 = vmatprep.subr.mxu0 0.0
    %563 = vmatpush1.msra.mxu0 %v534
    %564 = vmatprep.subr.mxu0 0.0
    %565 = vmatpush1.msra.mxu0 %v535
    %566 = vmatprep.subr.mxu0 0.0
    %567 = vmatpush1.msra.mxu0 0.0
    %568 = vmatprep.subr.mxu0 0.0
    %569 = vmatpush1.msra.mxu0 0.0
    %570 = vmatprep.subr.mxu0 0.0
    %571 = vmatpush1.msra.mxu0 0.0
    %572 = vmatprep.subr.mxu0 0.0
    %573 = vmatpush1.msra.mxu0 0.0
    %574 = vmatprep.subr.mxu0 0.0
    %575 = vmatpush1.msra.mxu0 0.0
    %576 = vmatprep.subr.mxu0 0.0
    %577 = vmatpush1.msra.mxu0 0.0
    %578 = vmatprep.subr.mxu0 0.0
    %579 = vmatpush1.msra.mxu0 0.0
    %580 = vmatprep.subr.mxu0 0.0
    %581 = vmatpush1.msra.mxu0 0.0
    %582 = vmatprep.subr.mxu0 0.0
    %583 = vmatpush1.msra.mxu0 0.0
    %584 = vmatprep.subr.mxu0 0.0
    %585 = vmatpush1.msra.mxu0 0.0
    %586 = vmatprep.subr.mxu0 0.0
    %587 = vmatpush1.msra.mxu0 0.0
    %588 = vmatprep.subr.mxu0 0.0
    %589 = vmatpush1.msra.mxu0 0.0
    %590 = vmatprep.subr.mxu0 0.0
    %591 = vmatpush1.msra.mxu0 0.0
    %592 = vmatprep.subr.mxu0 0.0
    %593 = vmatpush1.msra.mxu0 0.0
    %594 = vmatprep.subr.mxu0 0.0
    %595 = vmatpush1.msra.mxu0 0.0
    %596 = vmatprep.subr.mxu0 0.0
    %597 = vmatpush1.msra.mxu0 0.0
    %598 = vmatprep.subr.mxu0 0.0
    %599 = vmatpush1.msra.mxu0 0.0
    %600 = vmatprep.subr.mxu0 0.0
    %601 = vmatpush1.msra.mxu0 0.0
    %602 = vmatprep.subr.mxu0 0.0
    %603 = vmatpush1.msra.mxu0 0.0
    %604 = vmatprep.subr.mxu0 0.0
    %605 = vmatpush1.msra.mxu0 0.0
    %606 = vmatprep.subr.mxu0 0.0
    %607 = vmatpush1.msra.mxu0 0.0
    %608 = vmatprep.subr.mxu0 0.0
    %609 = vmatpush1.msra.mxu0 0.0
    %610 = vmatprep.subr.mxu0 0.0
    %611 = vmatpush1.msra.mxu0 0.0
    %612 = vmatprep.subr.mxu0 0.0
    %613 = vmatpush1.msra.mxu0 0.0
    %614 = vmatprep.mubr.f32.mxu0 0.0
    %615 = vmatmul.mubr.f32.gmra.mrb[0].mxu0 %v545
    %v616 = vpop.f32.mrb[0].mxu0
    %v617 = vadd.f32 %v541, %v616
    %v618 = vpop.f32.mrb[0].mxu0
    %619 = vmatprep.mubr.f32.mxu0 0.0
    %620 = vmatmul.mubr.f32.gmra.mrb[0].mxu0 %v548
    %v621 = vpop.f32.mrb[0].mxu0
    %v622 = vadd.f32 %v541, %v621
    %v623 = vpop.f32.mrb[0].mxu0
    %624 = vdwg.mxu0
    %625 = vst [vmem:[#allocation9] sm:$0xff] %v617
    %626 = vst [vmem:[#allocation9 + $0x8] sm:$0xff] %v622
    // Predicated region
    $region38: #{tpu_custom_call.1} parent=1 // pred_check
      _
    $region39: #{tpu_custom_call.1} parent=1 // pred_check_branch
      %628 = sbr.rel (0) target = $region41
    $region40: #{tpu_custom_call.1} parent=1 // pred_region
      %s630 = ssub.s32 256, 256
      %631 = vsyncadd [#allocation5], %s630
      %s632 = sshll.u32 [#allocation9], 4
      %s633 = int_to_ptr.vmem [resolvable:$true] %s632
      %638 = dma.vmem_to_hbm [thread:$0]  %s633, 256, %s5, [#allocation5], 128, 128, 8
    $region41: #{tpu_custom_call.1} parent=1 // pred_fallthru
      _
    // Predicated region
    $region42: #{tpu_custom_call.1} parent=1 // pred_check
      _
    $region43: #{tpu_custom_call.1} parent=1 // pred_check_branch
      %640 = sbr.rel (0) target = $region45
    $region44: #{tpu_custom_call.1} parent=1 // pred_region
      %641 = dma.done [#allocation5], 256
    $region45: #{tpu_custom_call.1} parent=1 // pred_fallthru
      _
    %642 = vsyncpa [#allocation4], 1
    %643 = vsyncpa [#allocation7], 1
    %644 = vsyncpa [#allocation5], 1

</llo_original>
